<compile_context>
chip_gen: v6e
topology: v6e:2x2x1
jax: 0.10.0
libtpu: 0.0.40
codegen_flags: <defaults>
</compile_context>

<pallas_src>
import functools

import jax
import jax.numpy as jnp
import numpy as np
from jax.experimental import pallas as pl
from jax.experimental.pallas import tpu as pltpu


def _round_up(x, m):
    return (x + m - 1) // m * m


def _pick_batch_tile(b8, batch_tile):
    """Largest multiple-of-8 divisor of b8 that is <= batch_tile.

    Prefers a tile that leaves >= 2 grid steps (megacore on v7x) when the
    batch is big enough, and -- because it always divides b8 -- never forces
    a full jnp.pad copy of the streamed activations.
    """
    cap = min(batch_tile, b8)
    best_single, best_multi = 8, 0
    t = 8
    while t <= cap:
        if b8 % t == 0:
            best_single = t
            if t < b8:
                best_multi = t
        t += 8
    if b8 >= 16 and best_multi >= 8:
        return best_multi
    return best_single


# ------------------------------- kernel --------------------------------------
def memory_kernel(lhs_ref, rhs_ref, bias_ref, wout_ref, ns_ref, out_ref, *,
                  un, neurons, precision):
    """One batch tile of the reservoir update; all units fused lane-dense.

    lhs = [state | X]                      [TB, UN+UD]
    rhs = [[W_bd*sr ,    0      ],         [UN+UD, 2*UN]
           [Win_bd  , alr_bd/T  ]]
    A single MXU matmul yields feed+echo (cols [:UN]) and the lane-expanded
    adaptive-lr logits (cols [UN:]).
    """
    lhs = lhs_ref[...]
    r = jnp.dot(lhs, rhs_ref[...],
                preferred_element_type=jnp.float32, precision=precision)

    fe = r[:, :un] + bias_ref[...]                   # feed + echo + bias

    # Adaptive lr: each unit's logit is replicated on its N lanes, so the
    # softmax-over-units denominator is sum(lanes) / N.  Exact divide (no
    # approximate reciprocal) keeps lr bit-accurate.
    # TODO(synk): if U*N grows past 128 lanes, compute the logits compactly
    # ([TB, U] padded to 128) and expand with a 0/1 indicator matmul.
    p = r[:, un:]
    p = p - jnp.max(p, axis=-1, keepdims=True)
    e = jnp.exp(p)
    denom = jnp.sum(e, axis=-1, keepdims=True)       # = N * softmax denom
    lr = e * (float(neurons) / denom)                # [TB, UN]

    s = lhs[:, :un].astype(jnp.float32)              # raw state (aligned prefix)
    ns = (1.0 - lr) * s + lr * jnp.tanh(fe)

    ns_ref[...] = ns.astype(ns_ref.dtype)
    out_ref[...] = jnp.dot(ns.astype(wout_ref.dtype), wout_ref[...],
                           preferred_element_type=jnp.float32,
                           precision=precision).astype(out_ref.dtype)


# ------------------------------- wrapper --------------------------------------
def memory_forward(X, state, params, *, batch_tile=512,
                   precision=jax.lax.Precision.HIGHEST, compute_dtype=None):
    """new_state, output = Memory.forward(X, state);  X: [B,U,D], state: [B,U,N]."""
    B, U, D = X.shape
    N = params["W"].shape[-1]
    O = params["Wout"].shape[-1]
    UD, UN, UO = U * D, U * N, U * O
    UO_pad = _round_up(UO, 128)

    # ---- fused weights (tiny XLA-side ops; fuse/const-fold under jit) -------
    # echo: state @ (sr_u * W_u) == state @ (rows of W_bd scaled by sr)
    w_sr = params["W_bd"] * params["sr_exp"].reshape(UN, 1)
    inv_temp = 1.0 / params["temp"][0]
    rhs = jnp.concatenate(
        [jnp.concatenate([w_sr, jnp.zeros((UN, UN), w_sr.dtype)], axis=1),
         jnp.concatenate([params["Win_bd"],
                          params["alr_bd"] * inv_temp], axis=1)],
        axis=0)                                               # [UN+UD, 2*UN]

    wout = params["Wout_bd"]
    if UO_pad != UO:          # lane-dense (128-multiple) readout -> full vst
        wout = jnp.pad(wout, ((0, 0), (0, UO_pad - UO)))

    # ---- activations: one lane-dense input stream [state | X] ---------------
    lhs = jnp.concatenate([state.reshape(B, UN), X.reshape(B, UD)], axis=-1)

    B8 = _round_up(B, 8)
    if B8 != B:               # at most 7 rows of sublane padding
        lhs = jnp.pad(lhs, ((0, B8 - B), (0, 0)))
    TB = _pick_batch_tile(B8, batch_tile)
    grid_b = B8 // TB

    if compute_dtype is not None:        # e.g. jnp.bfloat16 (operands only)
        lhs = lhs.astype(compute_dtype)
        rhs = rhs.astype(compute_dtype)
        wout = wout.astype(compute_dtype)

    kernel = functools.partial(memory_kernel, un=UN, neurons=N,
                               precision=precision)

    def batch_spec(width):
        return pl.BlockSpec((TB, width), lambda b: (b, 0))

    def const_spec(rows, cols):
        # Grid-invariant (constant index_map) -> resident across all steps.
        return pl.BlockSpec((rows, cols), lambda b: (0, 0))

    grid_spec = pltpu.PrefetchScalarGridSpec(
        num_scalar_prefetch=0,
        grid=(grid_b,),
        in_specs=[
            batch_spec(UN + UD),              # [state | X]
            const_spec(UN + UD, 2 * UN),      # fused [W*sr|0 ; Win|alr/T]
            const_spec(1, UN),                # bias
            const_spec(UN, UO_pad),           # readout (columns zero-padded)
        ],
        out_specs=(batch_spec(UN), batch_spec(UO_pad)),
    )

    new_state, output = pl.pallas_call(
        kernel,
        out_shape=(jax.ShapeDtypeStruct((B8, UN), state.dtype),
                   jax.ShapeDtypeStruct((B8, UO_pad), X.dtype)),
        grid_spec=grid_spec,
        compiler_params=pltpu.CompilerParams(
            dimension_semantics=("parallel",),   # batch axis -> both v7x TCs
            vmem_limit_bytes=32 * 1024 * 1024),
    )(lhs, rhs, params["bias_flat"], wout)

    return (new_state[:B].reshape(B, U, N),
            output[:B, :UO].reshape(B, U, O))


# ----------------------------- parameter setup --------------------------------
def _fixed_bernoulli(rng, shape, connectivity):
    """Each column of each head gets exactly k = max(1, int(conn*rows)) ones."""
    H, R, C = shape
    k = max(1, int(connectivity * R))
    m = np.zeros(shape, dtype=np.float32)
    for h in range(H):
        for c in range(C):
            idx = rng.permutation(R)[:k]
            m[h, idx, c] = 1.0
    return m


def _block_diag(blocks):
    """blocks: [U, R, C] -> [U*R, U*C] block-diagonal matrix."""
    U, R, C = blocks.shape
    out = np.zeros((U * R, U * C), dtype=blocks.dtype)
    for u in range(U):
        out[u * R:(u + 1) * R, u * C:(u + 1) * C] = blocks[u]
    return out


def init_params(units, neurons, input_dim, output_dim,
                res_connectivity=0.2, input_connectivity=0.2,
                bias_prob=0.5, seed=0):
    rng = np.random.default_rng(seed)
    W = rng.normal(size=(units, neurons, neurons)).astype(np.float32)
    W = W * _fixed_bernoulli(rng, (units, neurons, neurons), res_connectivity)
    # spectral-radius normalisation (host-side init glue, like torch eigvals)
    eig = np.linalg.eigvals(W.astype(np.float64))
    sr0 = np.abs(eig).max(axis=-1).reshape(units, 1, 1).astype(np.float32)
    W = W / sr0
    Win = _fixed_bernoulli(rng, (units, input_dim, neurons), input_connectivity)
    bias = (rng.random((units, neurons)) < bias_prob).astype(np.float32)
    Wout = rng.normal(size=(units, neurons, output_dim)).astype(np.float32)
    alr = rng.random((units, input_dim)).astype(np.float32)        # uniform_
    sr = rng.random((units,)).astype(np.float32)                   # torch.rand
    temp = np.ones((1,), dtype=np.float32)

    # kernel-side derived layouts (built once on host, not in-kernel)
    W_bd = _block_diag(W)                                          # [U*N, U*N]
    Win_bd = _block_diag(Win)                                      # [U*D, U*N]
    Wout_bd = _block_diag(Wout)                                    # [U*N, U*O]
    alr_bd = _block_diag(np.repeat(alr[:, :, None], neurons, axis=2))  # [U*D, U*N]
    bias_flat = bias.reshape(1, units * neurons)
    sr_exp = np.repeat(sr, neurons).reshape(1, units * neurons)

    d = dict(W=W, Win=Win, bias=bias, Wout=Wout, alr=alr, sr=sr, temp=temp,
             W_bd=W_bd, Win_bd=Win_bd, Wout_bd=Wout_bd, alr_bd=alr_bd,
             bias_flat=bias_flat, sr_exp=sr_exp)
    return {k: jnp.asarray(v) for k, v in d.items()}


# ------------------------------ pure-JAX reference -----------------------------
def memory_reference(X, state, params, precision=jax.lax.Precision.HIGHEST):
    p = jnp.einsum('bud,ud->bu', X, params["alr"],
                   precision=precision) / params["temp"][0]
    lr = jax.nn.softmax(p, axis=1)[..., None]                      # [B, U, 1]
    feed = jnp.einsum('bud,udn->bun', X, params["Win"], precision=precision)
    Wsr = params["W"] * params["sr"][:, None, None]
    echo = jnp.einsum('bun,unm->bum', state, Wsr,
                      precision=precision) + params["bias"][None]
    new_state = (1.0 - lr) * state + lr * jnp.tanh(feed + echo)
    out = jnp.einsum('bun,uno->buo', new_state, params["Wout"],
                     precision=precision)
    return new_state, out


if __name__ == "__main__":
    U, D, N, O = 4, 8, 32, 16          # units, input_dim, neurons, output_dim
    params = init_params(U, N, D, O)

    key = jax.random.PRNGKey(0)

    for B in (4, 20):                  # single-tile and multi-tile/padded paths
        kx, ks, key = jax.random.split(key, 3)
        X = jax.random.normal(kx, (B, U, D), dtype=jnp.float32)
        state = jax.random.normal(ks, (B, U, N), dtype=jnp.float32)

        new_state, output = memory_forward(X, state, params)
        jax.block_until_ready((new_state, output))

        ns_exp, out_exp = memory_reference(X, state, params)
        np.testing.assert_allclose(np.asarray(new_state), np.asarray(ns_exp),
                                   rtol=2e-3, atol=2e-3)
        np.testing.assert_allclose(np.asarray(output), np.asarray(out_exp),
                                   rtol=2e-3, atol=2e-3)

    print("KERNEL_OK")
</pallas_src>

<mosaic_0001>
module attributes {stable_mosaic.version = 11 : i64} {
  func.func @memory_kernel(%arg0: i32, %arg1: memref<8x160xf32, #tpu.memory_space<vmem>>, %arg2: memref<160x256xf32, #tpu.memory_space<vmem>>, %arg3: memref<1x128xf32, #tpu.memory_space<vmem>>, %arg4: memref<128x128xf32, #tpu.memory_space<vmem>>, %arg5: memref<8x128xf32, #tpu.memory_space<vmem>>, %arg6: memref<8x128xf32, #tpu.memory_space<vmem>>) attributes {dimension_semantics = [#tpu.dimension_semantics<parallel>], iteration_bounds = array<i64: 1>, scalar_prefetch = 0 : i64, scratch_operands = 0 : i64, tpu.core_type = #tpu.core_type<tc>, window_params = [{transform_indices = @transform_0, window_bounds = array<i64: 8, 160>}, {pipeline_mode = #tpu.pipeline_mode<synchronous>, transform_indices = @transform_1, window_bounds = array<i64: 160, 256>}, {pipeline_mode = #tpu.pipeline_mode<synchronous>, transform_indices = @transform_2, window_bounds = array<i64: 1, 128>}, {pipeline_mode = #tpu.pipeline_mode<synchronous>, transform_indices = @transform_3, window_bounds = array<i64: 128, 128>}, {transform_indices = @transform_4, window_bounds = array<i64: 8, 128>}, {transform_indices = @transform_5, window_bounds = array<i64: 8, 128>}]} {
    %c0 = arith.constant 0 : index
    %c0_0 = arith.constant 0 : index
    %0 = vector.load %arg1[%c0, %c0_0] : memref<8x160xf32, #tpu.memory_space<vmem>>, vector<8x160xf32>
    %c0_1 = arith.constant 0 : index
    %c0_2 = arith.constant 0 : index
    %1 = vector.load %arg2[%c0_1, %c0_2] : memref<160x256xf32, #tpu.memory_space<vmem>>, vector<160x256xf32>
    %cst = arith.constant dense<0.000000e+00> : vector<8x256xf32>
    %2 = tpu.matmul %0, %1, %cst {dimension_numbers = #tpu.dot_dimension_numbers<[1], [0], [0], [1], [0, 0, 1, 1], [], []>, precision = #tpu.contract_precision<fp32>} : vector<8x160xf32>, vector<160x256xf32>, vector<8x256xf32> -> vector<8x256xf32>
    %3 = vector.extract_strided_slice %2 {offsets = [0, 0], sizes = [8, 128], strides = [1, 1]} : vector<8x256xf32> to vector<8x128xf32>
    %c0_3 = arith.constant 0 : index
    %c0_4 = arith.constant 0 : index
    %4 = vector.load %arg3[%c0_3, %c0_4] : memref<1x128xf32, #tpu.memory_space<vmem>>, vector<1x128xf32>
    %5 = vector.broadcast %4 : vector<1x128xf32> to vector<8x128xf32>
    %6 = arith.addf %3, %5 : vector<8x128xf32>
    %7 = vector.extract_strided_slice %2 {offsets = [0, 128], sizes = [8, 128], strides = [1, 1]} : vector<8x256xf32> to vector<8x128xf32>
    %cst_5 = arith.constant dense<0xFF800000> : vector<8xf32>
    %8 = vector.multi_reduction <maximumf>, %7, %cst_5 [1] : vector<8x128xf32> to vector<8xf32>
    %9 = vector.shape_cast %8 : vector<8xf32> to vector<8x1xf32>
    %10 = vector.broadcast %9 : vector<8x1xf32> to vector<8x128xf32>
    %11 = arith.subf %7, %10 : vector<8x128xf32>
    %12 = math.exp %11 : vector<8x128xf32>
    %cst_6 = arith.constant dense<0.000000e+00> : vector<8xf32>
    %13 = vector.multi_reduction <add>, %12, %cst_6 [1] : vector<8x128xf32> to vector<8xf32>
    %14 = vector.shape_cast %13 : vector<8xf32> to vector<8x1xf32>
    %cst_7 = arith.constant 3.200000e+01 : f32
    %15 = vector.broadcast %cst_7 : f32 to vector<8x1xf32>
    %16 = arith.divf %15, %14 : vector<8x1xf32>
    %17 = vector.broadcast %16 : vector<8x1xf32> to vector<8x128xf32>
    %18 = arith.mulf %12, %17 : vector<8x128xf32>
    %19 = vector.extract_strided_slice %0 {offsets = [0, 0], sizes = [8, 128], strides = [1, 1]} : vector<8x160xf32> to vector<8x128xf32>
    %cst_8 = arith.constant 1.000000e+00 : f32
    %20 = vector.broadcast %cst_8 : f32 to vector<8x128xf32>
    %21 = arith.subf %20, %18 : vector<8x128xf32>
    %22 = arith.mulf %21, %19 : vector<8x128xf32>
    %23 = math.tanh %6 : vector<8x128xf32>
    %24 = arith.mulf %18, %23 : vector<8x128xf32>
    %25 = arith.addf %22, %24 : vector<8x128xf32>
    %c0_9 = arith.constant 0 : index
    %c0_10 = arith.constant 0 : index
    %26 = vector.load %arg5[%c0_9, %c0_10] : memref<8x128xf32, #tpu.memory_space<vmem>>, vector<8x128xf32>
    tpu.vector_store %arg5[%c0_9, %c0_10], %25 {strides = array<i32>} : memref<8x128xf32, #tpu.memory_space<vmem>>, vector<8x128xf32>,
    %c0_11 = arith.constant 0 : index
    %c0_12 = arith.constant 0 : index
    %27 = vector.load %arg4[%c0_11, %c0_12] : memref<128x128xf32, #tpu.memory_space<vmem>>, vector<128x128xf32>
    %cst_13 = arith.constant dense<0.000000e+00> : vector<8x128xf32>
    %28 = tpu.matmul %25, %27, %cst_13 {dimension_numbers = #tpu.dot_dimension_numbers<[1], [0], [0], [1], [0, 0, 1, 1], [], []>, precision = #tpu.contract_precision<fp32>} : vector<8x128xf32>, vector<128x128xf32>, vector<8x128xf32> -> vector<8x128xf32>
    %c0_14 = arith.constant 0 : index
    %c0_15 = arith.constant 0 : index
    %29 = vector.load %arg6[%c0_14, %c0_15] : memref<8x128xf32, #tpu.memory_space<vmem>>, vector<8x128xf32>
    tpu.vector_store %arg6[%c0_14, %c0_15], %28 {strides = array<i32>} : memref<8x128xf32, #tpu.memory_space<vmem>>, vector<8x128xf32>,
    return
  }
  func.func @transform_0(%arg0: i32) -> (i32, i32) {
    %c0_i32 = arith.constant 0 : i32
    %c0_i32_0 = arith.constant 0 : i32
    return %arg0, %c0_i32 : i32, i32
  }
  func.func @transform_1(%arg0: i32) -> (i32, i32) {
    %c0_i32 = arith.constant 0 : i32
    %c0_i32_0 = arith.constant 0 : i32
    %c0_i32_1 = arith.constant 0 : i32
    return %c0_i32, %c0_i32_0 : i32, i32
  }
  func.func @transform_2(%arg0: i32) -> (i32, i32) {
    %c0_i32 = arith.constant 0 : i32
    %c0_i32_0 = arith.constant 0 : i32
    %c0_i32_1 = arith.constant 0 : i32
    return %c0_i32, %c0_i32_0 : i32, i32
  }
  func.func @transform_3(%arg0: i32) -> (i32, i32) {
    %c0_i32 = arith.constant 0 : i32
    %c0_i32_0 = arith.constant 0 : i32
    %c0_i32_1 = arith.constant 0 : i32
    return %c0_i32, %c0_i32_0 : i32, i32
  }
  func.func @transform_4(%arg0: i32) -> (i32, i32) {
    %c0_i32 = arith.constant 0 : i32
    %c0_i32_0 = arith.constant 0 : i32
    return %arg0, %c0_i32 : i32, i32
  }
  func.func @transform_5(%arg0: i32) -> (i32, i32) {
    %c0_i32 = arith.constant 0 : i32
    %c0_i32_0 = arith.constant 0 : i32
    return %arg0, %c0_i32 : i32, i32
  }
}

</mosaic_0001>

<llo_original>
// kernel: tpu_custom_call.1
$region0: #{tpu_custom_call.1}
  #allocation0 [shape = 'u32[]', space=smem, size = 0x4, offset = 0x4, fixed_abs, tag = 'smem constant byte address 0x4 - core index']
  #allocation1 [shape = 'u32[144,128]{1,0:T(1,128)}', space=vmem, size = 0x12000, scoped, tag = 'internal scratch']
  %s0 = inlined_call_operand.hbm [shape: f32[8,160], index: 0, kind: input, shape index: {}]
  %s1 = inlined_call_operand.hbm [shape: f32[160,256], index: 1, kind: input, shape index: {}]
  %s2 = inlined_call_operand.vmem [shape: f32[1,128], index: 2, kind: input, shape index: {}]
  %s3 = inlined_call_operand.hbm [shape: f32[128,128], index: 3, kind: input, shape index: {}]
  %s4 = inlined_call_operand.hbm [shape: f32[8,128], index: 4, kind: output, shape index: {0}]
  %s5 = inlined_call_operand.hbm [shape: f32[8,128], index: 5, kind: output, shape index: {1}]
  %6 = xla_tuple %s4, %s5
  %s7 = sld [smem:[#allocation0]]
  $region46: #{tpu_custom_call.1} parent=0
    _
  %s9 = ssub.s32 1, %s7
  %s10 = scalar_select 0, %s9, %s7
  $region1: #{tpu_custom_call.1} parent=0
    #allocation2 [shape = 'u8[8192]{0}', space=vmem, size = 0x2000, scoped, tag = 'input window, operand 0, single buffered']
    #allocation3 [shape = 's32[1]{0}', space=sflag, size = 0x4, scoped, tag = 'scoped memory for tpu_custom_call.1']
    #allocation4 [shape = 's32[1]{0}', space=sflag, size = 0x4, scoped, tag = 'scoped memory for tpu_custom_call.1']
    #allocation5 [shape = 'u8[163840]{0}', space=vmem, size = 0x28000, scoped, tag = 'input window, operand 1, single buffered']
    #allocation6 [shape = 's32[1]{0}', space=sflag, size = 0x4, scoped, tag = 'scoped memory for tpu_custom_call.1']
    #allocation7 [shape = 'u8[65536]{0}', space=vmem, size = 0x10000, scoped, tag = 'input window, operand 3, single buffered']
    #allocation8 [shape = 'u8[4096]{0}', space=vmem, size = 0x1000, scoped, tag = 'output window, operand 0, single buffered']
    #allocation9 [shape = 'u8[4096]{0}', space=vmem, size = 0x1000, scoped, tag = 'output window, operand 1, single buffered']
    #allocation10 [shape = 's32[1]{0}', space=sflag, size = 0x4, scoped, tag = 'scoped memory for tpu_custom_call.1']
    %11 = vsyncpa [#allocation3], 0
    %12 = vsyncpa [#allocation6], 0
    %13 = vsyncpa [#allocation4], 0
    %14 = vsyncpa [#allocation10], 0
    // Predicated region
    $region2: #{tpu_custom_call.1} parent=1 // pred_check
      _
    $region3: #{tpu_custom_call.1} parent=1 // pred_check_branch
      %16 = sbr.rel (0) target = $region5
    $region4: #{tpu_custom_call.1} parent=1 // pred_region
      %s18 = ssub.s32 256, 256
      %19 = vsyncadd [#allocation3], %s18
      %s21 = sshll.u32 [#allocation2], 4
      %s22 = int_to_ptr.vmem [resolvable:$true] %s21
      %24 = dma.hbm_to_vmem [thread:$0]  %s0, 256, %s22, [#allocation3]
    $region5: #{tpu_custom_call.1} parent=1 // pred_fallthru
      _
    // Predicated region
    $region6: #{tpu_custom_call.1} parent=1 // pred_check
      _
    $region7: #{tpu_custom_call.1} parent=1 // pred_check_branch
      %26 = sbr.rel (0) target = $region9
    $region8: #{tpu_custom_call.1} parent=1 // pred_region
      %s28 = ssub.s32 5120, 5120
      %29 = vsyncadd [#allocation6], %s28
      %s30 = sshll.u32 [#allocation5], 4
      %s31 = int_to_ptr.vmem [resolvable:$true] %s30
      %36 = dma.hbm_to_vmem [thread:$0]  %s1, 5120, %s31, [#allocation6], 256, 256, 16
    $region9: #{tpu_custom_call.1} parent=1 // pred_fallthru
      _
    // Predicated region
    $region10: #{tpu_custom_call.1} parent=1 // pred_check
      _
    $region11: #{tpu_custom_call.1} parent=1 // pred_check_branch
      %38 = sbr.rel (0) target = $region13
    $region12: #{tpu_custom_call.1} parent=1 // pred_region
      _
    $region13: #{tpu_custom_call.1} parent=1 // pred_fallthru
      _
    // Predicated region
    $region14: #{tpu_custom_call.1} parent=1 // pred_check
      _
    $region15: #{tpu_custom_call.1} parent=1 // pred_check_branch
      %40 = sbr.rel (0) target = $region17
    $region16: #{tpu_custom_call.1} parent=1 // pred_region
      %s42 = ssub.s32 2048, 2048
      %43 = vsyncadd [#allocation6], %s42
      %s44 = sshll.u32 [#allocation7], 4
      %s45 = int_to_ptr.vmem [resolvable:$true] %s44
      %50 = dma.hbm_to_vmem [thread:$0]  %s3, 2048, %s45, [#allocation6], 128, 128, 8
    $region17: #{tpu_custom_call.1} parent=1 // pred_fallthru
      _
    // Predicated region
    $region18: #{tpu_custom_call.1} parent=1 // pred_check
      _
    $region19: #{tpu_custom_call.1} parent=1 // pred_check_branch
      %52 = sbr.rel (0) target = $region21
    $region20: #{tpu_custom_call.1} parent=1 // pred_region
      %53 = dma.done [#allocation3], 256
    $region21: #{tpu_custom_call.1} parent=1 // pred_fallthru
      _
    // Predicated region
    $region22: #{tpu_custom_call.1} parent=1 // pred_check
      _
    $region23: #{tpu_custom_call.1} parent=1 // pred_check_branch
      %55 = sbr.rel (0) target = $region25
    $region24: #{tpu_custom_call.1} parent=1 // pred_region
      %56 = dma.done [#allocation6], 5120
    $region25: #{tpu_custom_call.1} parent=1 // pred_fallthru
      _
    // Predicated region
    $region26: #{tpu_custom_call.1} parent=1 // pred_check
      _
    $region27: #{tpu_custom_call.1} parent=1 // pred_check_branch
      %58 = sbr.rel (0) target = $region29
    $region28: #{tpu_custom_call.1} parent=1 // pred_region
      %59 = dma.done [#allocation6], 2048
    $region29: #{tpu_custom_call.1} parent=1 // pred_fallthru
      _
    %v60 = vld [vmem:[#allocation2] sm:$0xff]
    %v61 = vld [vmem:[#allocation2 + $0x8] sm:$0xff]
    %v62 = vld [vmem:[#allocation5] sm:$0xff]
    %v63 = vld [vmem:[#allocation5 + $0x8] sm:$0xff]
    %v64 = vld [vmem:[#allocation5 + $0x10] sm:$0xff]
    %v65 = vld [vmem:[#allocation5 + $0x18] sm:$0xff]
    %v66 = vld [vmem:[#allocation5 + $0x20] sm:$0xff]
    %v67 = vld [vmem:[#allocation5 + $0x28] sm:$0xff]
    %v68 = vld [vmem:[#allocation5 + $0x30] sm:$0xff]
    %v69 = vld [vmem:[#allocation5 + $0x38] sm:$0xff]
    %v70 = vld [vmem:[#allocation5 + $0x40] sm:$0xff]
    %v71 = vld [vmem:[#allocation5 + $0x48] sm:$0xff]
    %v72 = vld [vmem:[#allocation5 + $0x50] sm:$0xff]
    %v73 = vld [vmem:[#allocation5 + $0x58] sm:$0xff]
    %v74 = vld [vmem:[#allocation5 + $0x60] sm:$0xff]
    %v75 = vld [vmem:[#allocation5 + $0x68] sm:$0xff]
    %v76 = vld [vmem:[#allocation5 + $0x70] sm:$0xff]
    %v77 = vld [vmem:[#allocation5 + $0x78] sm:$0xff]
    %v78 = vld [vmem:[#allocation5 + $0x80] sm:$0xff]
    %v79 = vld [vmem:[#allocation5 + $0x88] sm:$0xff]
    %v80 = vld [vmem:[#allocation5 + $0x90] sm:$0xff]
    %v81 = vld [vmem:[#allocation5 + $0x98] sm:$0xff]
    %v82 = vld [vmem:[#allocation5 + $0xa0] sm:$0xff]
    %v83 = vld [vmem:[#allocation5 + $0xa8] sm:$0xff]
    %v84 = vld [vmem:[#allocation5 + $0xb0] sm:$0xff]
    %v85 = vld [vmem:[#allocation5 + $0xb8] sm:$0xff]
    %v86 = vld [vmem:[#allocation5 + $0xc0] sm:$0xff]
    %v87 = vld [vmem:[#allocation5 + $0xc8] sm:$0xff]
    %v88 = vld [vmem:[#allocation5 + $0xd0] sm:$0xff]
    %v89 = vld [vmem:[#allocation5 + $0xd8] sm:$0xff]
    %v90 = vld [vmem:[#allocation5 + $0xe0] sm:$0xff]
    %v91 = vld [vmem:[#allocation5 + $0xe8] sm:$0xff]
    %v92 = vld [vmem:[#allocation5 + $0xf0] sm:$0xff]
    %v93 = vld [vmem:[#allocation5 + $0xf8] sm:$0xff]
    %v94 = vld [vmem:[#allocation5 + $0x100] sm:$0xff]
    %v95 = vld [vmem:[#allocation5 + $0x108] sm:$0xff]
    %v96 = vld [vmem:[#allocation5 + $0x110] sm:$0xff]
    %v97 = vld [vmem:[#allocation5 + $0x118] sm:$0xff]
    %v98 = vld [vmem:[#allocation5 + $0x120] sm:$0xff]
    %v99 = vld [vmem:[#allocation5 + $0x128] sm:$0xff]
    %v100 = vld [vmem:[#allocation5 + $0x130] sm:$0xff]
    %v101 = vld [vmem:[#allocation5 + $0x138] sm:$0xff]
    %vm102 = vcmask 261120
    %v104 = vsel %vm102, %v61, 0
    %v106 = vand.u32 %v93, 4294901760
    %107 = vmatprep.subr.mxu0 %v106
    %v108 = vand.u32 %v92, 4294901760
    %109 = vmatpush1.msra.mxu0 %v108
    %v110 = vand.u32 %v91, 4294901760
    %111 = vmatprep.subr.mxu0 %v110
    %v112 = vand.u32 %v90, 4294901760
    %113 = vmatpush1.msra.mxu0 %v112
    %v114 = vand.u32 %v89, 4294901760
    %115 = vmatprep.subr.mxu0 %v114
    %v116 = vand.u32 %v88, 4294901760
    %117 = vmatpush1.msra.mxu0 %v116
    %v118 = vand.u32 %v87, 4294901760
    %119 = vmatprep.subr.mxu0 %v118
    %v120 = vand.u32 %v86, 4294901760
    %121 = vmatpush1.msra.mxu0 %v120
    %v122 = vand.u32 %v85, 4294901760
    %123 = vmatprep.subr.mxu0 %v122
    %v124 = vand.u32 %v84, 4294901760
    %125 = vmatpush1.msra.mxu0 %v124
    %v126 = vand.u32 %v83, 4294901760
    %127 = vmatprep.subr.mxu0 %v126
    %v128 = vand.u32 %v82, 4294901760
    %129 = vmatpush1.msra.mxu0 %v128
    %v130 = vand.u32 %v81, 4294901760
    %131 = vmatprep.subr.mxu0 %v130
    %v132 = vand.u32 %v80, 4294901760
    %133 = vmatpush1.msra.mxu0 %v132
    %v134 = vand.u32 %v79, 4294901760
    %135 = vmatprep.subr.mxu0 %v134
    %v136 = vand.u32 %v78, 4294901760
    %137 = vmatpush1.msra.mxu0 %v136
    %v138 = vand.u32 %v77, 4294901760
    %139 = vmatprep.subr.mxu0 %v138
    %v140 = vand.u32 %v76, 4294901760
    %141 = vmatpush1.msra.mxu0 %v140
    %v142 = vand.u32 %v75, 4294901760
    %143 = vmatprep.subr.mxu0 %v142
    %v144 = vand.u32 %v74, 4294901760
    %145 = vmatpush1.msra.mxu0 %v144
    %v146 = vand.u32 %v73, 4294901760
    %147 = vmatprep.subr.mxu0 %v146
    %v148 = vand.u32 %v72, 4294901760
    %149 = vmatpush1.msra.mxu0 %v148
    %v150 = vand.u32 %v71, 4294901760
    %151 = vmatprep.subr.mxu0 %v150
    %v152 = vand.u32 %v70, 4294901760
    %153 = vmatpush1.msra.mxu0 %v152
    %v154 = vand.u32 %v69, 4294901760
    %155 = vmatprep.subr.mxu0 %v154
    %v156 = vand.u32 %v68, 4294901760
    %157 = vmatpush1.msra.mxu0 %v156
    %v158 = vand.u32 %v67, 4294901760
    %159 = vmatprep.subr.mxu0 %v158
    %v160 = vand.u32 %v66, 4294901760
    %161 = vmatpush1.msra.mxu0 %v160
    %v162 = vand.u32 %v65, 4294901760
    %163 = vmatprep.subr.mxu0 %v162
    %v164 = vand.u32 %v64, 4294901760
    %165 = vmatpush1.msra.mxu0 %v164
    %v166 = vand.u32 %v63, 4294901760
    %167 = vmatprep.subr.mxu0 %v166
    %v168 = vand.u32 %v62, 4294901760
    %169 = vmatpush1.msra.mxu0 %v168
    %170 = vmatprep.subr.mxu0 0.0
    %171 = vmatpush2.msra.mxu0 0.0
    %172 = vmatprep.subr.mxu0 0.0
    %173 = vmatpush2.msra.mxu0 0.0
    %174 = vmatprep.subr.mxu0 0.0
    %175 = vmatpush2.msra.mxu0 0.0
    %176 = vmatprep.subr.mxu0 0.0
    %177 = vmatpush2.msra.mxu0 0.0
    %178 = vmatprep.subr.mxu0 0.0
    %179 = vmatpush2.msra.mxu0 0.0
    %180 = vmatprep.subr.mxu0 0.0
    %181 = vmatpush2.msra.mxu0 0.0
    %182 = vmatprep.subr.mxu0 0.0
    %183 = vmatpush2.msra.mxu0 0.0
    %184 = vmatprep.subr.mxu0 0.0
    %185 = vmatpush2.msra.mxu0 0.0
    %186 = vmatprep.subr.mxu0 0.0
    %187 = vmatpush2.msra.mxu0 0.0
    %188 = vmatprep.subr.mxu0 0.0
    %189 = vmatpush2.msra.mxu0 0.0
    %190 = vmatprep.subr.mxu0 0.0
    %191 = vmatpush2.msra.mxu0 0.0
    %192 = vmatprep.subr.mxu0 0.0
    %193 = vmatpush2.msra.mxu0 0.0
    %v194 = vand.u32 %v101, 4294901760
    %195 = vmatprep.subr.mxu0 %v194
    %v196 = vand.u32 %v100, 4294901760
    %197 = vmatpush2.msra.mxu0 %v196
    %v198 = vand.u32 %v99, 4294901760
    %199 = vmatprep.subr.mxu0 %v198
    %v200 = vand.u32 %v98, 4294901760
    %201 = vmatpush2.msra.mxu0 %v200
    %v202 = vand.u32 %v97, 4294901760
    %203 = vmatprep.subr.mxu0 %v202
    %v204 = vand.u32 %v96, 4294901760
    %205 = vmatpush2.msra.mxu0 %v204
    %v206 = vand.u32 %v95, 4294901760
    %207 = vmatprep.subr.mxu0 %v206
    %v208 = vand.u32 %v94, 4294901760
    %209 = vmatpush2.msra.mxu0 %v208
    %v210 = vand.u32 %v104, 4294901760
    %v211 = vsub.f32 %v104, %v210
    %v212 = vand.u32 %v211, 4294901760
    %v213 = vsub.f32 %v211, %v212
    %v214 = vand.u32 %v213, 4294901760
    %215 = vmatprep.mubr.f32.mxu0 %v214
    %v216 = vand.u32 %v60, 4294901760
    %v217 = vsub.f32 %v60, %v216
    %v218 = vand.u32 %v217, 4294901760
    %v219 = vsub.f32 %v217, %v218
    %v220 = vand.u32 %v219, 4294901760
    %221 = vmatmul.mubr.f32.gmra.mxu0 %v220
    %v222 = vpop.f32.mrf.mxu0
    %v223 = vadd.f32 0.0, %v222
    %v224 = vpop.f32.mrf.mxu0
    %v225 = vadd.f32 0.0, %v224
    %226 = vdwg.mxu0
    %v227 = vand.u32 %v93, 4294901760
    %v228 = vsub.f32 %v93, %v227
    %v229 = vand.u32 %v228, 4294901760
    %v230 = vsub.f32 %v228, %v229
    %v231 = vand.u32 %v230, 4294901760
    %232 = vmatprep.subr.mxu0 %v231
    %v233 = vand.u32 %v92, 4294901760
    %v234 = vsub.f32 %v92, %v233
    %v235 = vand.u32 %v234, 4294901760
    %v236 = vsub.f32 %v234, %v235
    %v237 = vand.u32 %v236, 4294901760
    %238 = vmatpush1.msra.mxu0 %v237
    %v239 = vand.u32 %v91, 4294901760
    %v240 = vsub.f32 %v91, %v239
    %v241 = vand.u32 %v240, 4294901760
    %v242 = vsub.f32 %v240, %v241
    %v243 = vand.u32 %v242, 4294901760
    %244 = vmatprep.subr.mxu0 %v243
    %v245 = vand.u32 %v90, 4294901760
    %v246 = vsub.f32 %v90, %v245
    %v247 = vand.u32 %v246, 4294901760
    %v248 = vsub.f32 %v246, %v247
    %v249 = vand.u32 %v248, 4294901760
    %250 = vmatpush1.msra.mxu0 %v249
    %v251 = vand.u32 %v89, 4294901760
    %v252 = vsub.f32 %v89, %v251
    %v253 = vand.u32 %v252, 4294901760
    %v254 = vsub.f32 %v252, %v253
    %v255 = vand.u32 %v254, 4294901760
    %256 = vmatprep.subr.mxu0 %v255
    %v257 = vand.u32 %v88, 4294901760
    %v258 = vsub.f32 %v88, %v257
    %v259 = vand.u32 %v258, 4294901760
    %v260 = vsub.f32 %v258, %v259
    %v261 = vand.u32 %v260, 4294901760
    %262 = vmatpush1.msra.mxu0 %v261
    %v263 = vand.u32 %v87, 4294901760
    %v264 = vsub.f32 %v87, %v263
    %v265 = vand.u32 %v264, 4294901760
    %v266 = vsub.f32 %v264, %v265
    %v267 = vand.u32 %v266, 4294901760
    %268 = vmatprep.subr.mxu0 %v267
    %v269 = vand.u32 %v86, 4294901760
    %v270 = vsub.f32 %v86, %v269
    %v271 = vand.u32 %v270, 4294901760
    %v272 = vsub.f32 %v270, %v271
    %v273 = vand.u32 %v272, 4294901760
    %274 = vmatpush1.msra.mxu0 %v273
    %v275 = vand.u32 %v85, 4294901760
    %v276 = vsub.f32 %v85, %v275
    %v277 = vand.u32 %v276, 4294901760
    %v278 = vsub.f32 %v276, %v277
    %v279 = vand.u32 %v278, 4294901760
    %280 = vmatprep.subr.mxu0 %v279
    %v281 = vand.u32 %v84, 4294901760
    %v282 = vsub.f32 %v84, %v281
    %v283 = vand.u32 %v282, 4294901760
    %v284 = vsub.f32 %v282, %v283
    %v285 = vand.u32 %v284, 4294901760
    %286 = vmatpush1.msra.mxu0 %v285
    %v287 = vand.u32 %v83, 4294901760
    %v288 = vsub.f32 %v83, %v287
    %v289 = vand.u32 %v288, 4294901760
    %v290 = vsub.f32 %v288, %v289
    %v291 = vand.u32 %v290, 4294901760
    %292 = vmatprep.subr.mxu0 %v291
    %v293 = vand.u32 %v82, 4294901760
    %v294 = vsub.f32 %v82, %v293
    %v295 = vand.u32 %v294, 4294901760
    %v296 = vsub.f32 %v294, %v295
    %v297 = vand.u32 %v296, 4294901760
    %298 = vmatpush1.msra.mxu0 %v297
    %v299 = vand.u32 %v81, 4294901760
    %v300 = vsub.f32 %v81, %v299
    %v301 = vand.u32 %v300, 4294901760
    %v302 = vsub.f32 %v300, %v301
    %v303 = vand.u32 %v302, 4294901760
    %304 = vmatprep.subr.mxu0 %v303
    %v305 = vand.u32 %v80, 4294901760
    %v306 = vsub.f32 %v80, %v305
    %v307 = vand.u32 %v306, 4294901760
    %v308 = vsub.f32 %v306, %v307
    %v309 = vand.u32 %v308, 4294901760
    %310 = vmatpush1.msra.mxu0 %v309
    %v311 = vand.u32 %v79, 4294901760
    %v312 = vsub.f32 %v79, %v311
    %v313 = vand.u32 %v312, 4294901760
    %v314 = vsub.f32 %v312, %v313
    %v315 = vand.u32 %v314, 4294901760
    %316 = vmatprep.subr.mxu0 %v315
    %v317 = vand.u32 %v78, 4294901760
    %v318 = vsub.f32 %v78, %v317
    %v319 = vand.u32 %v318, 4294901760
    %v320 = vsub.f32 %v318, %v319
    %v321 = vand.u32 %v320, 4294901760
    %322 = vmatpush1.msra.mxu0 %v321
    %v323 = vand.u32 %v77, 4294901760
    %v324 = vsub.f32 %v77, %v323
    %v325 = vand.u32 %v324, 4294901760
    %v326 = vsub.f32 %v324, %v325
    %v327 = vand.u32 %v326, 4294901760
    %328 = vmatprep.subr.mxu0 %v327
    %v329 = vand.u32 %v76, 4294901760
    %v330 = vsub.f32 %v76, %v329
    %v331 = vand.u32 %v330, 4294901760
    %v332 = vsub.f32 %v330, %v331
    %v333 = vand.u32 %v332, 4294901760
    %334 = vmatpush1.msra.mxu0 %v333
    %v335 = vand.u32 %v75, 4294901760
    %v336 = vsub.f32 %v75, %v335
    %v337 = vand.u32 %v336, 4294901760
    %v338 = vsub.f32 %v336, %v337
    %v339 = vand.u32 %v338, 4294901760
    %340 = vmatprep.subr.mxu0 %v339
    %v341 = vand.u32 %v74, 4294901760
    %v342 = vsub.f32 %v74, %v341
    %v343 = vand.u32 %v342, 4294901760
    %v344 = vsub.f32 %v342, %v343
    %v345 = vand.u32 %v344, 4294901760
    %346 = vmatpush1.msra.mxu0 %v345
    %v347 = vand.u32 %v73, 4294901760
    %v348 = vsub.f32 %v73, %v347
    %v349 = vand.u32 %v348, 4294901760
    %v350 = vsub.f32 %v348, %v349
    %v351 = vand.u32 %v350, 4294901760
    %352 = vmatprep.subr.mxu0 %v351
    %v353 = vand.u32 %v72, 4294901760
    %v354 = vsub.f32 %v72, %v353
    %v355 = vand.u32 %v354, 4294901760
    %v356 = vsub.f32 %v354, %v355
    %v357 = vand.u32 %v356, 4294901760
    %358 = vmatpush1.msra.mxu0 %v357
    %v359 = vand.u32 %v71, 4294901760
    %v360 = vsub.f32 %v71, %v359
    %v361 = vand.u32 %v360, 4294901760
    %v362 = vsub.f32 %v360, %v361
    %v363 = vand.u32 %v362, 4294901760
    %364 = vmatprep.subr.mxu0 %v363
    %v365 = vand.u32 %v70, 4294901760
    %v366 = vsub.f32 %v70, %v365
    %v367 = vand.u32 %v366, 4294901760
    %v368 = vsub.f32 %v366, %v367
    %v369 = vand.u32 %v368, 4294901760
    %370 = vmatpush1.msra.mxu0 %v369
    %v371 = vand.u32 %v69, 4294901760
    %v372 = vsub.f32 %v69, %v371
    %v373 = vand.u32 %v372, 4294901760
    %v374 = vsub.f32 %v372, %v373
    %v375 = vand.u32 %v374, 4294901760
    %376 = vmatprep.subr.mxu0 %v375
    %v377 = vand.u32 %v68, 4294901760
    %v378 = vsub.f32 %v68, %v377
    %v379 = vand.u32 %v378, 4294901760
    %v380 = vsub.f32 %v378, %v379
    %v381 = vand.u32 %v380, 4294901760
    %382 = vmatpush1.msra.mxu0 %v381
    %v383 = vand.u32 %v67, 4294901760
    %v384 = vsub.f32 %v67, %v383
    %v385 = vand.u32 %v384, 4294901760
    %v386 = vsub.f32 %v384, %v385
    %v387 = vand.u32 %v386, 4294901760
    %388 = vmatprep.subr.mxu0 %v387
    %v389 = vand.u32 %v66, 4294901760
    %v390 = vsub.f32 %v66, %v389
    %v391 = vand.u32 %v390, 4294901760
    %v392 = vsub.f32 %v390, %v391
    %v393 = vand.u32 %v392, 4294901760
    %394 = vmatpush1.msra.mxu0 %v393
    %v395 = vand.u32 %v65, 4294901760
    %v396 = vsub.f32 %v65, %v395
    %v397 = vand.u32 %v396, 4294901760
    %v398 = vsub.f32 %v396, %v397
    %v399 = vand.u32 %v398, 4294901760
    %400 = vmatprep.subr.mxu0 %v399
    %v401 = vand.u32 %v64, 4294901760
    %v402 = vsub.f32 %v64, %v401
    %v403 = vand.u32 %v402, 4294901760
    %v404 = vsub.f32 %v402, %v403
    %v405 = vand.u32 %v404, 4294901760
    %406 = vmatpush1.msra.mxu0 %v405
    %v407 = vand.u32 %v63, 4294901760
    %v408 = vsub.f32 %v63, %v407
    %v409 = vand.u32 %v408, 4294901760
    %v410 = vsub.f32 %v408, %v409
    %v411 = vand.u32 %v410, 4294901760
    %412 = vmatprep.subr.mxu0 %v411
    %v413 = vand.u32 %v62, 4294901760
    %v414 = vsub.f32 %v62, %v413
    %v415 = vand.u32 %v414, 4294901760
    %v416 = vsub.f32 %v414, %v415
    %v417 = vand.u32 %v416, 4294901760
    %418 = vmatpush1.msra.mxu0 %v417
    %419 = vmatprep.subr.mxu0 0.0
    %420 = vmatpush2.msra.mxu0 0.0
    %421 = vmatprep.subr.mxu0 0.0
    %422 = vmatpush2.msra.mxu0 0.0
    %423 = vmatprep.subr.mxu0 0.0
    %424 = vmatpush2.msra.mxu0 0.0
    %425 = vmatprep.subr.mxu0 0.0
    %426 = vmatpush2.msra.mxu0 0.0
    %427 = vmatprep.subr.mxu0 0.0
    %428 = vmatpush2.msra.mxu0 0.0
    %429 = vmatprep.subr.mxu0 0.0
    %430 = vmatpush2.msra.mxu0 0.0
    %431 = vmatprep.subr.mxu0 0.0
    %432 = vmatpush2.msra.mxu0 0.0
    %433 = vmatprep.subr.mxu0 0.0
    %434 = vmatpush2.msra.mxu0 0.0
    %435 = vmatprep.subr.mxu0 0.0
    %436 = vmatpush2.msra.mxu0 0.0
    %437 = vmatprep.subr.mxu0 0.0
    %438 = vmatpush2.msra.mxu0 0.0
    %439 = vmatprep.subr.mxu0 0.0
    %440 = vmatpush2.msra.mxu0 0.0
    %441 = vmatprep.subr.mxu0 0.0
    %442 = vmatpush2.msra.mxu0 0.0
    %v443 = vand.u32 %v101, 4294901760
    %v444 = vsub.f32 %v101, %v443
    %v445 = vand.u32 %v444, 4294901760
    %v446 = vsub.f32 %v444, %v445
    %v447 = vand.u32 %v446, 4294901760
    %448 = vmatprep.subr.mxu0 %v447
    %v449 = vand.u32 %v100, 4294901760
    %v450 = vsub.f32 %v100, %v449
    %v451 = vand.u32 %v450, 4294901760
    %v452 = vsub.f32 %v450, %v451
    %v453 = vand.u32 %v452, 4294901760
    %454 = vmatpush2.msra.mxu0 %v453
    %v455 = vand.u32 %v99, 4294901760
    %v456 = vsub.f32 %v99, %v455
    %v457 = vand.u32 %v456, 4294901760
    %v458 = vsub.f32 %v456, %v457
    %v459 = vand.u32 %v458, 4294901760
    %460 = vmatprep.subr.mxu0 %v459
    %v461 = vand.u32 %v98, 4294901760
    %v462 = vsub.f32 %v98, %v461
    %v463 = vand.u32 %v462, 4294901760
    %v464 = vsub.f32 %v462, %v463
    %v465 = vand.u32 %v464, 4294901760
    %466 = vmatpush2.msra.mxu0 %v465
    %v467 = vand.u32 %v97, 4294901760
    %v468 = vsub.f32 %v97, %v467
    %v469 = vand.u32 %v468, 4294901760
    %v470 = vsub.f32 %v468, %v469
    %v471 = vand.u32 %v470, 4294901760
    %472 = vmatprep.subr.mxu0 %v471
    %v473 = vand.u32 %v96, 4294901760
    %v474 = vsub.f32 %v96, %v473
    %v475 = vand.u32 %v474, 4294901760
    %v476 = vsub.f32 %v474, %v475
    %v477 = vand.u32 %v476, 4294901760
    %478 = vmatpush2.msra.mxu0 %v477
    %v479 = vand.u32 %v95, 4294901760
    %v480 = vsub.f32 %v95, %v479
    %v481 = vand.u32 %v480, 4294901760
    %v482 = vsub.f32 %v480, %v481
    %v483 = vand.u32 %v482, 4294901760
    %484 = vmatprep.subr.mxu0 %v483
    %v485 = vand.u32 %v94, 4294901760
    %v486 = vsub.f32 %v94, %v485
    %v487 = vand.u32 %v486, 4294901760
    %v488 = vsub.f32 %v486, %v487
    %v489 = vand.u32 %v488, 4294901760
    %490 = vmatpush2.msra.mxu0 %v489
    %v491 = vand.u32 %v104, 4294901760
    %492 = vmatprep.mubr.f32.mxu0 %v491
    %v493 = vand.u32 %v60, 4294901760
    %494 = vmatmul.mubr.f32.gmra.mxu0 %v493
    %v495 = vpop.f32.mrf.mxu0
    %v496 = vadd.f32 %v223, %v495
    %v497 = vpop.f32.mrf.mxu0
    %v498 = vadd.f32 %v225, %v497
    %499 = vdwg.mxu0
    %v500 = vand.u32 %v93, 4294901760
    %v501 = vsub.f32 %v93, %v500
    %502 = vmatprep.subr.mxu0 %v501
    %v503 = vand.u32 %v92, 4294901760
    %v504 = vsub.f32 %v92, %v503
    %505 = vmatpush1.msra.mxu0 %v504
    %v506 = vand.u32 %v91, 4294901760
    %v507 = vsub.f32 %v91, %v506
    %508 = vmatprep.subr.mxu0 %v507
    %v509 = vand.u32 %v90, 4294901760
    %v510 = vsub.f32 %v90, %v509
    %511 = vmatpush1.msra.mxu0 %v510
    %v512 = vand.u32 %v89, 4294901760
    %v513 = vsub.f32 %v89, %v512
    %514 = vmatprep.subr.mxu0 %v513
    %v515 = vand.u32 %v88, 4294901760
    %v516 = vsub.f32 %v88, %v515
    %517 = vmatpush1.msra.mxu0 %v516
    %v518 = vand.u32 %v87, 4294901760
    %v519 = vsub.f32 %v87, %v518
    %520 = vmatprep.subr.mxu0 %v519
    %v521 = vand.u32 %v86, 4294901760
    %v522 = vsub.f32 %v86, %v521
    %523 = vmatpush1.msra.mxu0 %v522
    %v524 = vand.u32 %v85, 4294901760
    %v525 = vsub.f32 %v85, %v524
    %526 = vmatprep.subr.mxu0 %v525
    %v527 = vand.u32 %v84, 4294901760
    %v528 = vsub.f32 %v84, %v527
    %529 = vmatpush1.msra.mxu0 %v528
    %v530 = vand.u32 %v83, 4294901760
    %v531 = vsub.f32 %v83, %v530
    %532 = vmatprep.subr.mxu0 %v531
    %v533 = vand.u32 %v82, 4294901760
    %v534 = vsub.f32 %v82, %v533
    %535 = vmatpush1.msra.mxu0 %v534
    %v536 = vand.u32 %v81, 4294901760
    %v537 = vsub.f32 %v81, %v536
    %538 = vmatprep.subr.mxu0 %v537
    %v539 = vand.u32 %v80, 4294901760
    %v540 = vsub.f32 %v80, %v539
    %541 = vmatpush1.msra.mxu0 %v540
    %v542 = vand.u32 %v79, 4294901760
    %v543 = vsub.f32 %v79, %v542
    %544 = vmatprep.subr.mxu0 %v543
    %v545 = vand.u32 %v78, 4294901760
    %v546 = vsub.f32 %v78, %v545
    %547 = vmatpush1.msra.mxu0 %v546
    %v548 = vand.u32 %v77, 4294901760
    %v549 = vsub.f32 %v77, %v548
    %550 = vmatprep.subr.mxu0 %v549
    %v551 = vand.u32 %v76, 4294901760
    %v552 = vsub.f32 %v76, %v551
    %553 = vmatpush1.msra.mxu0 %v552
    %v554 = vand.u32 %v75, 4294901760
    %v555 = vsub.f32 %v75, %v554
    %556 = vmatprep.subr.mxu0 %v555
    %v557 = vand.u32 %v74, 4294901760
    %v558 = vsub.f32 %v74, %v557
    %559 = vmatpush1.msra.mxu0 %v558
    %v560 = vand.u32 %v73, 4294901760
    %v561 = vsub.f32 %v73, %v560
    %562 = vmatprep.subr.mxu0 %v561
    %v563 = vand.u32 %v72, 4294901760
    %v564 = vsub.f32 %v72, %v563
    %565 = vmatpush1.msra.mxu0 %v564
    %v566 = vand.u32 %v71, 4294901760
    %v567 = vsub.f32 %v71, %v566
    %568 = vmatprep.subr.mxu0 %v567
    %v569 = vand.u32 %v70, 4294901760
    %v570 = vsub.f32 %v70, %v569
    %571 = vmatpush1.msra.mxu0 %v570
    %v572 = vand.u32 %v69, 4294901760
    %v573 = vsub.f32 %v69, %v572
    %574 = vmatprep.subr.mxu0 %v573
    %v575 = vand.u32 %v68, 4294901760
    %v576 = vsub.f32 %v68, %v575
    %577 = vmatpush1.msra.mxu0 %v576
    %v578 = vand.u32 %v67, 4294901760
    %v579 = vsub.f32 %v67, %v578
    %580 = vmatprep.subr.mxu0 %v579
    %v581 = vand.u32 %v66, 4294901760
    %v582 = vsub.f32 %v66, %v581
    %583 = vmatpush1.msra.mxu0 %v582
    %v584 = vand.u32 %v65, 4294901760
    %v585 = vsub.f32 %v65, %v584
    %586 = vmatprep.subr.mxu0 %v585
    %v587 = vand.u32 %v64, 4294901760
    %v588 = vsub.f32 %v64, %v587
    %589 = vmatpush1.msra.mxu0 %v588
    %v590 = vand.u32 %v63, 4294901760
    %v591 = vsub.f32 %v63, %v590
    %592 = vmatprep.subr.mxu0 %v591
    %v593 = vand.u32 %v62, 4294901760
    %v594 = vsub.f32 %v62, %v593
    %595 = vmatpush1.msra.mxu0 %v594
    %596 = vmatprep.subr.mxu0 0.0
    %597 = vmatpush2.msra.mxu0 0.0
    %598 = vmatprep.subr.mxu0 0.0
    %599 = vmatpush2.msra.mxu0 0.0
    %600 = vmatprep.subr.mxu0 0.0
    %601 = vmatpush2.msra.mxu0 0.0
    %602 = vmatprep.subr.mxu0 0.0
    %603 = vmatpush2.msra.mxu0 0.0
    %604 = vmatprep.subr.mxu0 0.0
    %605 = vmatpush2.msra.mxu0 0.0
    %606 = vmatprep.subr.mxu0 0.0
    %607 = vmatpush2.msra.mxu0 0.0
    %608 = vmatprep.subr.mxu0 0.0
    %609 = vmatpush2.msra.mxu0 0.0
    %610 = vmatprep.subr.mxu0 0.0
    %611 = vmatpush2.msra.mxu0 0.0
    %612 = vmatprep.subr.mxu0 0.0
    %613 = vmatpush2.msra.mxu0 0.0
    %614 = vmatprep.subr.mxu0 0.0
    %615 = vmatpush2.msra.mxu0 0.0
    %616 = vmatprep.subr.mxu0 0.0
    %617 = vmatpush2.msra.mxu0 0.0
    %618 = vmatprep.subr.mxu0 0.0
    %619 = vmatpush2.msra.mxu0 0.0
    %v620 = vand.u32 %v101, 4294901760
    %v621 = vsub.f32 %v101, %v620
    %622 = vmatprep.subr.mxu0 %v621
    %v623 = vand.u32 %v100, 4294901760
    %v624 = vsub.f32 %v100, %v623
    %625 = vmatpush2.msra.mxu0 %v624
    %v626 = vand.u32 %v99, 4294901760
    %v627 = vsub.f32 %v99, %v626
    %628 = vmatprep.subr.mxu0 %v627
    %v629 = vand.u32 %v98, 4294901760
    %v630 = vsub.f32 %v98, %v629
    %631 = vmatpush2.msra.mxu0 %v630
    %v632 = vand.u32 %v97, 4294901760
    %v633 = vsub.f32 %v97, %v632
    %634 = vmatprep.subr.mxu0 %v633
    %v635 = vand.u32 %v96, 4294901760
    %v636 = vsub.f32 %v96, %v635
    %637 = vmatpush2.msra.mxu0 %v636
    %v638 = vand.u32 %v95, 4294901760
    %v639 = vsub.f32 %v95, %v638
    %640 = vmatprep.subr.mxu0 %v639
    %v641 = vand.u32 %v94, 4294901760
    %v642 = vsub.f32 %v94, %v641
    %643 = vmatpush2.msra.mxu0 %v642
    %v644 = vand.u32 %v104, 4294901760
    %v645 = vsub.f32 %v104, %v644
    %646 = vmatprep.mubr.f32.mxu0 %v645
    %v647 = vand.u32 %v60, 4294901760
    %v648 = vsub.f32 %v60, %v647
    %649 = vmatmul.mubr.f32.gmra.mxu0 %v648
    %v650 = vpop.f32.mrf.mxu0
    %v651 = vadd.f32 %v496, %v650
    %v652 = vpop.f32.mrf.mxu0
    %v653 = vadd.f32 %v498, %v652
    %654 = vdwg.mxu0
    %v655 = vand.u32 %v93, 4294901760
    %656 = vmatprep.subr.mxu0 %v655
    %v657 = vand.u32 %v92, 4294901760
    %658 = vmatpush1.msra.mxu0 %v657
    %v659 = vand.u32 %v91, 4294901760
    %660 = vmatprep.subr.mxu0 %v659
    %v661 = vand.u32 %v90, 4294901760
    %662 = vmatpush1.msra.mxu0 %v661
    %v663 = vand.u32 %v89, 4294901760
    %664 = vmatprep.subr.mxu0 %v663
    %v665 = vand.u32 %v88, 4294901760
    %666 = vmatpush1.msra.mxu0 %v665
    %v667 = vand.u32 %v87, 4294901760
    %668 = vmatprep.subr.mxu0 %v667
    %v669 = vand.u32 %v86, 4294901760
    %670 = vmatpush1.msra.mxu0 %v669
    %v671 = vand.u32 %v85, 4294901760
    %672 = vmatprep.subr.mxu0 %v671
    %v673 = vand.u32 %v84, 4294901760
    %674 = vmatpush1.msra.mxu0 %v673
    %v675 = vand.u32 %v83, 4294901760
    %676 = vmatprep.subr.mxu0 %v675
    %v677 = vand.u32 %v82, 4294901760
    %678 = vmatpush1.msra.mxu0 %v677
    %v679 = vand.u32 %v81, 4294901760
    %680 = vmatprep.subr.mxu0 %v679
    %v681 = vand.u32 %v80, 4294901760
    %682 = vmatpush1.msra.mxu0 %v681
    %v683 = vand.u32 %v79, 4294901760
    %684 = vmatprep.subr.mxu0 %v683
    %v685 = vand.u32 %v78, 4294901760
    %686 = vmatpush1.msra.mxu0 %v685
    %v687 = vand.u32 %v77, 4294901760
    %688 = vmatprep.subr.mxu0 %v687
    %v689 = vand.u32 %v76, 4294901760
    %690 = vmatpush1.msra.mxu0 %v689
    %v691 = vand.u32 %v75, 4294901760
    %692 = vmatprep.subr.mxu0 %v691
    %v693 = vand.u32 %v74, 4294901760
    %694 = vmatpush1.msra.mxu0 %v693
    %v695 = vand.u32 %v73, 4294901760
    %696 = vmatprep.subr.mxu0 %v695
    %v697 = vand.u32 %v72, 4294901760
    %698 = vmatpush1.msra.mxu0 %v697
    %v699 = vand.u32 %v71, 4294901760
    %700 = vmatprep.subr.mxu0 %v699
    %v701 = vand.u32 %v70, 4294901760
    %702 = vmatpush1.msra.mxu0 %v701
    %v703 = vand.u32 %v69, 4294901760
    %704 = vmatprep.subr.mxu0 %v703
    %v705 = vand.u32 %v68, 4294901760
    %706 = vmatpush1.msra.mxu0 %v705
    %v707 = vand.u32 %v67, 4294901760
    %708 = vmatprep.subr.mxu0 %v707
    %v709 = vand.u32 %v66, 4294901760
    %710 = vmatpush1.msra.mxu0 %v709
    %v711 = vand.u32 %v65, 4294901760
    %712 = vmatprep.subr.mxu0 %v711
    %v713 = vand.u32 %v64, 4294901760
    %714 = vmatpush1.msra.mxu0 %v713
    %v715 = vand.u32 %v63, 4294901760
    %716 = vmatprep.subr.mxu0 %v715
    %v717 = vand.u32 %v62, 4294901760
    %718 = vmatpush1.msra.mxu0 %v717
    %719 = vmatprep.subr.mxu0 0.0
    %720 = vmatpush2.msra.mxu0 0.0
    %721 = vmatprep.subr.mxu0 0.0
    %722 = vmatpush2.msra.mxu0 0.0
    %723 = vmatprep.subr.mxu0 0.0
    %724 = vmatpush2.msra.mxu0 0.0
    %725 = vmatprep.subr.mxu0 0.0
    %726 = vmatpush2.msra.mxu0 0.0
    %727 = vmatprep.subr.mxu0 0.0
    %728 = vmatpush2.msra.mxu0 0.0
    %729 = vmatprep.subr.mxu0 0.0
    %730 = vmatpush2.msra.mxu0 0.0
    %731 = vmatprep.subr.mxu0 0.0
    %732 = vmatpush2.msra.mxu0 0.0
    %733 = vmatprep.subr.mxu0 0.0
    %734 = vmatpush2.msra.mxu0 0.0
    %735 = vmatprep.subr.mxu0 0.0
    %736 = vmatpush2.msra.mxu0 0.0
    %737 = vmatprep.subr.mxu0 0.0
    %738 = vmatpush2.msra.mxu0 0.0
    %739 = vmatprep.subr.mxu0 0.0
    %740 = vmatpush2.msra.mxu0 0.0
    %741 = vmatprep.subr.mxu0 0.0
    %742 = vmatpush2.msra.mxu0 0.0
    %v743 = vand.u32 %v101, 4294901760
    %744 = vmatprep.subr.mxu0 %v743
    %v745 = vand.u32 %v100, 4294901760
    %746 = vmatpush2.msra.mxu0 %v745
    %v747 = vand.u32 %v99, 4294901760
    %748 = vmatprep.subr.mxu0 %v747
    %v749 = vand.u32 %v98, 4294901760
    %750 = vmatpush2.msra.mxu0 %v749
    %v751 = vand.u32 %v97, 4294901760
    %752 = vmatprep.subr.mxu0 %v751
    %v753 = vand.u32 %v96, 4294901760
    %754 = vmatpush2.msra.mxu0 %v753
    %v755 = vand.u32 %v95, 4294901760
    %756 = vmatprep.subr.mxu0 %v755
    %v757 = vand.u32 %v94, 4294901760
    %758 = vmatpush2.msra.mxu0 %v757
    %v759 = vand.u32 %v104, 4294901760
    %v760 = vsub.f32 %v104, %v759
    %v761 = vand.u32 %v760, 4294901760
    %762 = vmatprep.mubr.f32.mxu0 %v761
    %v763 = vand.u32 %v60, 4294901760
    %v764 = vsub.f32 %v60, %v763
    %v765 = vand.u32 %v764, 4294901760
    %766 = vmatmul.mubr.f32.gmra.mxu0 %v765
    %v767 = vpop.f32.mrf.mxu0
    %v768 = vadd.f32 %v651, %v767
    %v769 = vpop.f32.mrf.mxu0
    %v770 = vadd.f32 %v653, %v769
    %771 = vdwg.mxu0
    %v772 = vand.u32 %v93, 4294901760
    %v773 = vsub.f32 %v93, %v772
    %v774 = vand.u32 %v773, 4294901760
    %775 = vmatprep.subr.mxu0 %v774
    %v776 = vand.u32 %v92, 4294901760
    %v777 = vsub.f32 %v92, %v776
    %v778 = vand.u32 %v777, 4294901760
    %779 = vmatpush1.msra.mxu0 %v778
    %v780 = vand.u32 %v91, 4294901760
    %v781 = vsub.f32 %v91, %v780
    %v782 = vand.u32 %v781, 4294901760
    %783 = vmatprep.subr.mxu0 %v782
    %v784 = vand.u32 %v90, 4294901760
    %v785 = vsub.f32 %v90, %v784
    %v786 = vand.u32 %v785, 4294901760
    %787 = vmatpush1.msra.mxu0 %v786
    %v788 = vand.u32 %v89, 4294901760
    %v789 = vsub.f32 %v89, %v788
    %v790 = vand.u32 %v789, 4294901760
    %791 = vmatprep.subr.mxu0 %v790
    %v792 = vand.u32 %v88, 4294901760
    %v793 = vsub.f32 %v88, %v792
    %v794 = vand.u32 %v793, 4294901760
    %795 = vmatpush1.msra.mxu0 %v794
    %v796 = vand.u32 %v87, 4294901760
    %v797 = vsub.f32 %v87, %v796
    %v798 = vand.u32 %v797, 4294901760
    %799 = vmatprep.subr.mxu0 %v798
    %v800 = vand.u32 %v86, 4294901760
    %v801 = vsub.f32 %v86, %v800
    %v802 = vand.u32 %v801, 4294901760
    %803 = vmatpush1.msra.mxu0 %v802
    %v804 = vand.u32 %v85, 4294901760
    %v805 = vsub.f32 %v85, %v804
    %v806 = vand.u32 %v805, 4294901760
    %807 = vmatprep.subr.mxu0 %v806
    %v808 = vand.u32 %v84, 4294901760
    %v809 = vsub.f32 %v84, %v808
    %v810 = vand.u32 %v809, 4294901760
    %811 = vmatpush1.msra.mxu0 %v810
    %v812 = vand.u32 %v83, 4294901760
    %v813 = vsub.f32 %v83, %v812
    %v814 = vand.u32 %v813, 4294901760
    %815 = vmatprep.subr.mxu0 %v814
    %v816 = vand.u32 %v82, 4294901760
    %v817 = vsub.f32 %v82, %v816
    %v818 = vand.u32 %v817, 4294901760
    %819 = vmatpush1.msra.mxu0 %v818
    %v820 = vand.u32 %v81, 4294901760
    %v821 = vsub.f32 %v81, %v820
    %v822 = vand.u32 %v821, 4294901760
    %823 = vmatprep.subr.mxu0 %v822
    %v824 = vand.u32 %v80, 4294901760
    %v825 = vsub.f32 %v80, %v824
    %v826 = vand.u32 %v825, 4294901760
    %827 = vmatpush1.msra.mxu0 %v826
    %v828 = vand.u32 %v79, 4294901760
    %v829 = vsub.f32 %v79, %v828
    %v830 = vand.u32 %v829, 4294901760
    %831 = vmatprep.subr.mxu0 %v830
    %v832 = vand.u32 %v78, 4294901760
    %v833 = vsub.f32 %v78, %v832
    %v834 = vand.u32 %v833, 4294901760
    %835 = vmatpush1.msra.mxu0 %v834
    %v836 = vand.u32 %v77, 4294901760
    %v837 = vsub.f32 %v77, %v836
    %v838 = vand.u32 %v837, 4294901760
    %839 = vmatprep.subr.mxu0 %v838
    %v840 = vand.u32 %v76, 4294901760
    %v841 = vsub.f32 %v76, %v840
    %v842 = vand.u32 %v841, 4294901760
    %843 = vmatpush1.msra.mxu0 %v842
    %v844 = vand.u32 %v75, 4294901760
    %v845 = vsub.f32 %v75, %v844
    %v846 = vand.u32 %v845, 4294901760
    %847 = vmatprep.subr.mxu0 %v846
    %v848 = vand.u32 %v74, 4294901760
    %v849 = vsub.f32 %v74, %v848
    %v850 = vand.u32 %v849, 4294901760
    %851 = vmatpush1.msra.mxu0 %v850
    %v852 = vand.u32 %v73, 4294901760
    %v853 = vsub.f32 %v73, %v852
    %v854 = vand.u32 %v853, 4294901760
    %855 = vmatprep.subr.mxu0 %v854
    %v856 = vand.u32 %v72, 4294901760
    %v857 = vsub.f32 %v72, %v856
    %v858 = vand.u32 %v857, 4294901760
    %859 = vmatpush1.msra.mxu0 %v858
    %v860 = vand.u32 %v71, 4294901760
    %v861 = vsub.f32 %v71, %v860
    %v862 = vand.u32 %v861, 4294901760
    %863 = vmatprep.subr.mxu0 %v862
    %v864 = vand.u32 %v70, 4294901760
    %v865 = vsub.f32 %v70, %v864
    %v866 = vand.u32 %v865, 4294901760
    %867 = vmatpush1.msra.mxu0 %v866
    %v868 = vand.u32 %v69, 4294901760
    %v869 = vsub.f32 %v69, %v868
    %v870 = vand.u32 %v869, 4294901760
    %871 = vmatprep.subr.mxu0 %v870
    %v872 = vand.u32 %v68, 4294901760
    %v873 = vsub.f32 %v68, %v872
    %v874 = vand.u32 %v873, 4294901760
    %875 = vmatpush1.msra.mxu0 %v874
    %v876 = vand.u32 %v67, 4294901760
    %v877 = vsub.f32 %v67, %v876
    %v878 = vand.u32 %v877, 4294901760
    %879 = vmatprep.subr.mxu0 %v878
    %v880 = vand.u32 %v66, 4294901760
    %v881 = vsub.f32 %v66, %v880
    %v882 = vand.u32 %v881, 4294901760
    %883 = vmatpush1.msra.mxu0 %v882
    %v884 = vand.u32 %v65, 4294901760
    %v885 = vsub.f32 %v65, %v884
    %v886 = vand.u32 %v885, 4294901760
    %887 = vmatprep.subr.mxu0 %v886
    %v888 = vand.u32 %v64, 4294901760
    %v889 = vsub.f32 %v64, %v888
    %v890 = vand.u32 %v889, 4294901760
    %891 = vmatpush1.msra.mxu0 %v890
    %v892 = vand.u32 %v63, 4294901760
    %v893 = vsub.f32 %v63, %v892
    %v894 = vand.u32 %v893, 4294901760
    %895 = vmatprep.subr.mxu0 %v894
    %v896 = vand.u32 %v62, 4294901760
    %v897 = vsub.f32 %v62, %v896
    %v898 = vand.u32 %v897, 4294901760
    %899 = vmatpush1.msra.mxu0 %v898
    %900 = vmatprep.subr.mxu0 0.0
    %901 = vmatpush2.msra.mxu0 0.0
    %902 = vmatprep.subr.mxu0 0.0
    %903 = vmatpush2.msra.mxu0 0.0
    %904 = vmatprep.subr.mxu0 0.0
    %905 = vmatpush2.msra.mxu0 0.0
    %906 = vmatprep.subr.mxu0 0.0
    %907 = vmatpush2.msra.mxu0 0.0
    %908 = vmatprep.subr.mxu0 0.0
    %909 = vmatpush2.msra.mxu0 0.0
    %910 = vmatprep.subr.mxu0 0.0
    %911 = vmatpush2.msra.mxu0 0.0
    %912 = vmatprep.subr.mxu0 0.0
    %913 = vmatpush2.msra.mxu0 0.0
    %914 = vmatprep.subr.mxu0 0.0
    %915 = vmatpush2.msra.mxu0 0.0
    %916 = vmatprep.subr.mxu0 0.0
    %917 = vmatpush2.msra.mxu0 0.0
    %918 = vmatprep.subr.mxu0 0.0
    %919 = vmatpush2.msra.mxu0 0.0
    %920 = vmatprep.subr.mxu0 0.0
    %921 = vmatpush2.msra.mxu0 0.0
    %922 = vmatprep.subr.mxu0 0.0
    %923 = vmatpush2.msra.mxu0 0.0
    %v924 = vand.u32 %v101, 4294901760
    %v925 = vsub.f32 %v101, %v924
    %v926 = vand.u32 %v925, 4294901760
    %927 = vmatprep.subr.mxu0 %v926
    %v928 = vand.u32 %v100, 4294901760
    %v929 = vsub.f32 %v100, %v928
    %v930 = vand.u32 %v929, 4294901760
    %931 = vmatpush2.msra.mxu0 %v930
    %v932 = vand.u32 %v99, 4294901760
    %v933 = vsub.f32 %v99, %v932
    %v934 = vand.u32 %v933, 4294901760
    %935 = vmatprep.subr.mxu0 %v934
    %v936 = vand.u32 %v98, 4294901760
    %v937 = vsub.f32 %v98, %v936
    %v938 = vand.u32 %v937, 4294901760
    %939 = vmatpush2.msra.mxu0 %v938
    %v940 = vand.u32 %v97, 4294901760
    %v941 = vsub.f32 %v97, %v940
    %v942 = vand.u32 %v941, 4294901760
    %943 = vmatprep.subr.mxu0 %v942
    %v944 = vand.u32 %v96, 4294901760
    %v945 = vsub.f32 %v96, %v944
    %v946 = vand.u32 %v945, 4294901760
    %947 = vmatpush2.msra.mxu0 %v946
    %v948 = vand.u32 %v95, 4294901760
    %v949 = vsub.f32 %v95, %v948
    %v950 = vand.u32 %v949, 4294901760
    %951 = vmatprep.subr.mxu0 %v950
    %v952 = vand.u32 %v94, 4294901760
    %v953 = vsub.f32 %v94, %v952
    %v954 = vand.u32 %v953, 4294901760
    %955 = vmatpush2.msra.mxu0 %v954
    %v956 = vand.u32 %v104, 4294901760
    %957 = vmatprep.mubr.f32.mxu0 %v956
    %v958 = vand.u32 %v60, 4294901760
    %959 = vmatmul.mubr.f32.gmra.mxu0 %v958
    %v960 = vpop.f32.mrf.mxu0
    %v961 = vadd.f32 %v768, %v960
    %v962 = vpop.f32.mrf.mxu0
    %v963 = vadd.f32 %v770, %v962
    %964 = vdwg.mxu0
    %v965 = vand.u32 %v93, 4294901760
    %966 = vmatprep.subr.mxu0 %v965
    %v967 = vand.u32 %v92, 4294901760
    %968 = vmatpush1.msra.mxu0 %v967
    %v969 = vand.u32 %v91, 4294901760
    %970 = vmatprep.subr.mxu0 %v969
    %v971 = vand.u32 %v90, 4294901760
    %972 = vmatpush1.msra.mxu0 %v971
    %v973 = vand.u32 %v89, 4294901760
    %974 = vmatprep.subr.mxu0 %v973
    %v975 = vand.u32 %v88, 4294901760
    %976 = vmatpush1.msra.mxu0 %v975
    %v977 = vand.u32 %v87, 4294901760
    %978 = vmatprep.subr.mxu0 %v977
    %v979 = vand.u32 %v86, 4294901760
    %980 = vmatpush1.msra.mxu0 %v979
    %v981 = vand.u32 %v85, 4294901760
    %982 = vmatprep.subr.mxu0 %v981
    %v983 = vand.u32 %v84, 4294901760
    %984 = vmatpush1.msra.mxu0 %v983
    %v985 = vand.u32 %v83, 4294901760
    %986 = vmatprep.subr.mxu0 %v985
    %v987 = vand.u32 %v82, 4294901760
    %988 = vmatpush1.msra.mxu0 %v987
    %v989 = vand.u32 %v81, 4294901760
    %990 = vmatprep.subr.mxu0 %v989
    %v991 = vand.u32 %v80, 4294901760
    %992 = vmatpush1.msra.mxu0 %v991
    %v993 = vand.u32 %v79, 4294901760
    %994 = vmatprep.subr.mxu0 %v993
    %v995 = vand.u32 %v78, 4294901760
    %996 = vmatpush1.msra.mxu0 %v995
    %v997 = vand.u32 %v77, 4294901760
    %998 = vmatprep.subr.mxu0 %v997
    %v999 = vand.u32 %v76, 4294901760
    %1000 = vmatpush1.msra.mxu0 %v999
    %v1001 = vand.u32 %v75, 4294901760
    %1002 = vmatprep.subr.mxu0 %v1001
    %v1003 = vand.u32 %v74, 4294901760
    %1004 = vmatpush1.msra.mxu0 %v1003
    %v1005 = vand.u32 %v73, 4294901760
    %1006 = vmatprep.subr.mxu0 %v1005
    %v1007 = vand.u32 %v72, 4294901760
    %1008 = vmatpush1.msra.mxu0 %v1007
    %v1009 = vand.u32 %v71, 4294901760
    %1010 = vmatprep.subr.mxu0 %v1009
    %v1011 = vand.u32 %v70, 4294901760
    %1012 = vmatpush1.msra.mxu0 %v1011
    %v1013 = vand.u32 %v69, 4294901760
    %1014 = vmatprep.subr.mxu0 %v1013
    %v1015 = vand.u32 %v68, 4294901760
    %1016 = vmatpush1.msra.mxu0 %v1015
    %v1017 = vand.u32 %v67, 4294901760
    %1018 = vmatprep.subr.mxu0 %v1017
    %v1019 = vand.u32 %v66, 4294901760
    %1020 = vmatpush1.msra.mxu0 %v1019
    %v1021 = vand.u32 %v65, 4294901760
    %1022 = vmatprep.subr.mxu0 %v1021
    %v1023 = vand.u32 %v64, 4294901760
    %1024 = vmatpush1.msra.mxu0 %v1023
    %v1025 = vand.u32 %v63, 4294901760
    %1026 = vmatprep.subr.mxu0 %v1025
    %v1027 = vand.u32 %v62, 4294901760
    %1028 = vmatpush1.msra.mxu0 %v1027
    %1029 = vmatprep.subr.mxu0 0.0
    %1030 = vmatpush2.msra.mxu0 0.0
    %1031 = vmatprep.subr.mxu0 0.0
    %1032 = vmatpush2.msra.mxu0 0.0
    %1033 = vmatprep.subr.mxu0 0.0
    %1034 = vmatpush2.msra.mxu0 0.0
    %1035 = vmatprep.subr.mxu0 0.0
    %1036 = vmatpush2.msra.mxu0 0.0
    %1037 = vmatprep.subr.mxu0 0.0
    %1038 = vmatpush2.msra.mxu0 0.0
    %1039 = vmatprep.subr.mxu0 0.0
    %1040 = vmatpush2.msra.mxu0 0.0
    %1041 = vmatprep.subr.mxu0 0.0
    %1042 = vmatpush2.msra.mxu0 0.0
    %1043 = vmatprep.subr.mxu0 0.0
    %1044 = vmatpush2.msra.mxu0 0.0
    %1045 = vmatprep.subr.mxu0 0.0
    %1046 = vmatpush2.msra.mxu0 0.0
    %1047 = vmatprep.subr.mxu0 0.0
    %1048 = vmatpush2.msra.mxu0 0.0
    %1049 = vmatprep.subr.mxu0 0.0
    %1050 = vmatpush2.msra.mxu0 0.0
    %1051 = vmatprep.subr.mxu0 0.0
    %1052 = vmatpush2.msra.mxu0 0.0
    %v1053 = vand.u32 %v101, 4294901760
    %1054 = vmatprep.subr.mxu0 %v1053
    %v1055 = vand.u32 %v100, 4294901760
    %1056 = vmatpush2.msra.mxu0 %v1055
    %v1057 = vand.u32 %v99, 4294901760
    %1058 = vmatprep.subr.mxu0 %v1057
    %v1059 = vand.u32 %v98, 4294901760
    %1060 = vmatpush2.msra.mxu0 %v1059
    %v1061 = vand.u32 %v97, 4294901760
    %1062 = vmatprep.subr.mxu0 %v1061
    %v1063 = vand.u32 %v96, 4294901760
    %1064 = vmatpush2.msra.mxu0 %v1063
    %v1065 = vand.u32 %v95, 4294901760
    %1066 = vmatprep.subr.mxu0 %v1065
    %v1067 = vand.u32 %v94, 4294901760
    %1068 = vmatpush2.msra.mxu0 %v1067
    %v1069 = vand.u32 %v104, 4294901760
    %1070 = vmatprep.mubr.f32.mxu0 %v1069
    %v1071 = vand.u32 %v60, 4294901760
    %1072 = vmatmul.mubr.f32.gmra.mxu0 %v1071
    %v1073 = vpop.f32.mrf.mxu0
    %v1074 = vadd.f32 %v961, %v1073
    %v1075 = vpop.f32.mrf.mxu0
    %v1076 = vadd.f32 %v963, %v1075
    %1077 = vdwg.mxu0
    %v1078 = vld [vmem:[%s2] sm:$0x1]
    %v1080 = vlaneseq
    %v1081 = vshrl.u32 %v1080, 7
    %v1082 = vsub.s32 0, %v1081
    %v1083 = vrot.slane %v1078, %v1082
    %v1085 = vadd.f32 %v1074, %v1083
    %1086 = vmax.xlane.f32.xlu0 %v1076
    %v1087 = vpop.xlane.xlu0 %1086
    %v1088 = vsub.f32 %v1076, %v1087
    %v1089 = vmul.f32 %v1088, 1.442695
    %v1090 = vpow.pop %v1089
    %1091 = vadd.xlane.f32.xlu0 %v1090
    %v1092 = vpop.xlane.xlu0 %1091
    %v1093 = vrcp.pop %v1092
    %v1094 = vmul.f32 32.0, %v1093
    %v1095 = vmul.f32 %v1090, %v1094
    %v1096 = vsub.f32 1.0, %v1095
    %v1097 = vmul.f32 %v1096, %v60
    %v1098 = vtanh.pop %v1085
    %v1099 = vmul.f32 %v1095, %v1098
    %v1100 = vadd.f32 %v1097, %v1099
    %1101 = vst [vmem:[#allocation8] sm:$0xff] %v1100
    %v1102 = vld [vmem:[#allocation7] sm:$0xff]
    %v1103 = vld [vmem:[#allocation7 + $0x8] sm:$0xff]
    %v1104 = vld [vmem:[#allocation7 + $0x10] sm:$0xff]
    %v1105 = vld [vmem:[#allocation7 + $0x18] sm:$0xff]
    %v1106 = vld [vmem:[#allocation7 + $0x20] sm:$0xff]
    %v1107 = vld [vmem:[#allocation7 + $0x28] sm:$0xff]
    %v1108 = vld [vmem:[#allocation7 + $0x30] sm:$0xff]
    %v1109 = vld [vmem:[#allocation7 + $0x38] sm:$0xff]
    %v1110 = vld [vmem:[#allocation7 + $0x40] sm:$0xff]
    %v1111 = vld [vmem:[#allocation7 + $0x48] sm:$0xff]
    %v1112 = vld [vmem:[#allocation7 + $0x50] sm:$0xff]
    %v1113 = vld [vmem:[#allocation7 + $0x58] sm:$0xff]
    %v1114 = vld [vmem:[#allocation7 + $0x60] sm:$0xff]
    %v1115 = vld [vmem:[#allocation7 + $0x68] sm:$0xff]
    %v1116 = vld [vmem:[#allocation7 + $0x70] sm:$0xff]
    %v1117 = vld [vmem:[#allocation7 + $0x78] sm:$0xff]
    %1118 = vmatprep.subr.mxu0 0.0
    %v1119 = vand.u32 %v1117, 4294901760
    %1120 = vmatpush1.msra.mxu0 %v1119
    %1121 = vmatprep.subr.mxu0 0.0
    %v1122 = vand.u32 %v1116, 4294901760
    %1123 = vmatpush1.msra.mxu0 %v1122
    %1124 = vmatprep.subr.mxu0 0.0
    %v1125 = vand.u32 %v1115, 4294901760
    %1126 = vmatpush1.msra.mxu0 %v1125
    %1127 = vmatprep.subr.mxu0 0.0
    %v1128 = vand.u32 %v1114, 4294901760
    %1129 = vmatpush1.msra.mxu0 %v1128
    %1130 = vmatprep.subr.mxu0 0.0
    %v1131 = vand.u32 %v1113, 4294901760
    %1132 = vmatpush1.msra.mxu0 %v1131
    %1133 = vmatprep.subr.mxu0 0.0
    %v1134 = vand.u32 %v1112, 4294901760
    %1135 = vmatpush1.msra.mxu0 %v1134
    %1136 = vmatprep.subr.mxu0 0.0
    %v1137 = vand.u32 %v1111, 4294901760
    %1138 = vmatpush1.msra.mxu0 %v1137
    %1139 = vmatprep.subr.mxu0 0.0
    %v1140 = vand.u32 %v1110, 4294901760
    %1141 = vmatpush1.msra.mxu0 %v1140
    %1142 = vmatprep.subr.mxu0 0.0
    %v1143 = vand.u32 %v1109, 4294901760
    %1144 = vmatpush1.msra.mxu0 %v1143
    %1145 = vmatprep.subr.mxu0 0.0
    %v1146 = vand.u32 %v1108, 4294901760
    %1147 = vmatpush1.msra.mxu0 %v1146
    %1148 = vmatprep.subr.mxu0 0.0
    %v1149 = vand.u32 %v1107, 4294901760
    %1150 = vmatpush1.msra.mxu0 %v1149
    %1151 = vmatprep.subr.mxu0 0.0
    %v1152 = vand.u32 %v1106, 4294901760
    %1153 = vmatpush1.msra.mxu0 %v1152
    %1154 = vmatprep.subr.mxu0 0.0
    %v1155 = vand.u32 %v1105, 4294901760
    %1156 = vmatpush1.msra.mxu0 %v1155
    %1157 = vmatprep.subr.mxu0 0.0
    %v1158 = vand.u32 %v1104, 4294901760
    %1159 = vmatpush1.msra.mxu0 %v1158
    %1160 = vmatprep.subr.mxu0 0.0
    %v1161 = vand.u32 %v1103, 4294901760
    %1162 = vmatpush1.msra.mxu0 %v1161
    %1163 = vmatprep.subr.mxu0 0.0
    %v1164 = vand.u32 %v1102, 4294901760
    %1165 = vmatpush1.msra.mxu0 %v1164
    %1166 = vmatprep.subr.mxu0 0.0
    %1167 = vmatpush2.msra.mxu0 0.0
    %1168 = vmatprep.subr.mxu0 0.0
    %1169 = vmatpush2.msra.mxu0 0.0
    %1170 = vmatprep.subr.mxu0 0.0
    %1171 = vmatpush2.msra.mxu0 0.0
    %1172 = vmatprep.subr.mxu0 0.0
    %1173 = vmatpush2.msra.mxu0 0.0
    %1174 = vmatprep.subr.mxu0 0.0
    %1175 = vmatpush2.msra.mxu0 0.0
    %1176 = vmatprep.subr.mxu0 0.0
    %1177 = vmatpush2.msra.mxu0 0.0
    %1178 = vmatprep.subr.mxu0 0.0
    %1179 = vmatpush2.msra.mxu0 0.0
    %1180 = vmatprep.subr.mxu0 0.0
    %1181 = vmatpush2.msra.mxu0 0.0
    %1182 = vmatprep.subr.mxu0 0.0
    %1183 = vmatpush2.msra.mxu0 0.0
    %1184 = vmatprep.subr.mxu0 0.0
    %1185 = vmatpush2.msra.mxu0 0.0
    %1186 = vmatprep.subr.mxu0 0.0
    %1187 = vmatpush2.msra.mxu0 0.0
    %1188 = vmatprep.subr.mxu0 0.0
    %1189 = vmatpush2.msra.mxu0 0.0
    %1190 = vmatprep.subr.mxu0 0.0
    %1191 = vmatpush2.msra.mxu0 0.0
    %1192 = vmatprep.subr.mxu0 0.0
    %1193 = vmatpush2.msra.mxu0 0.0
    %1194 = vmatprep.subr.mxu0 0.0
    %1195 = vmatpush2.msra.mxu0 0.0
    %1196 = vmatprep.subr.mxu0 0.0
    %1197 = vmatpush2.msra.mxu0 0.0
    %1198 = vmatprep.mubr.f32.mxu0 0.0
    %v1199 = vand.u32 %v1100, 4294901760
    %v1200 = vsub.f32 %v1100, %v1199
    %v1201 = vand.u32 %v1200, 4294901760
    %v1202 = vsub.f32 %v1200, %v1201
    %v1203 = vand.u32 %v1202, 4294901760
    %1204 = vmatmul.mubr.f32.gmra.mxu0 %v1203
    %v1205 = vpop.f32.mrf.mxu0
    %v1206 = vadd.f32 0.0, %v1205
    %v1207 = vpop.f32.mrf.mxu0
    %1208 = vdwg.mxu0
    %1209 = vmatprep.subr.mxu0 0.0
    %v1210 = vand.u32 %v1117, 4294901760
    %v1211 = vsub.f32 %v1117, %v1210
    %v1212 = vand.u32 %v1211, 4294901760
    %v1213 = vsub.f32 %v1211, %v1212
    %v1214 = vand.u32 %v1213, 4294901760
    %1215 = vmatpush1.msra.mxu0 %v1214
    %1216 = vmatprep.subr.mxu0 0.0
    %v1217 = vand.u32 %v1116, 4294901760
    %v1218 = vsub.f32 %v1116, %v1217
    %v1219 = vand.u32 %v1218, 4294901760
    %v1220 = vsub.f32 %v1218, %v1219
    %v1221 = vand.u32 %v1220, 4294901760
    %1222 = vmatpush1.msra.mxu0 %v1221
    %1223 = vmatprep.subr.mxu0 0.0
    %v1224 = vand.u32 %v1115, 4294901760
    %v1225 = vsub.f32 %v1115, %v1224
    %v1226 = vand.u32 %v1225, 4294901760
    %v1227 = vsub.f32 %v1225, %v1226
    %v1228 = vand.u32 %v1227, 4294901760
    %1229 = vmatpush1.msra.mxu0 %v1228
    %1230 = vmatprep.subr.mxu0 0.0
    %v1231 = vand.u32 %v1114, 4294901760
    %v1232 = vsub.f32 %v1114, %v1231
    %v1233 = vand.u32 %v1232, 4294901760
    %v1234 = vsub.f32 %v1232, %v1233
    %v1235 = vand.u32 %v1234, 4294901760
    %1236 = vmatpush1.msra.mxu0 %v1235
    %1237 = vmatprep.subr.mxu0 0.0
    %v1238 = vand.u32 %v1113, 4294901760
    %v1239 = vsub.f32 %v1113, %v1238
    %v1240 = vand.u32 %v1239, 4294901760
    %v1241 = vsub.f32 %v1239, %v1240
    %v1242 = vand.u32 %v1241, 4294901760
    %1243 = vmatpush1.msra.mxu0 %v1242
    %1244 = vmatprep.subr.mxu0 0.0
    %v1245 = vand.u32 %v1112, 4294901760
    %v1246 = vsub.f32 %v1112, %v1245
    %v1247 = vand.u32 %v1246, 4294901760
    %v1248 = vsub.f32 %v1246, %v1247
    %v1249 = vand.u32 %v1248, 4294901760
    %1250 = vmatpush1.msra.mxu0 %v1249
    %1251 = vmatprep.subr.mxu0 0.0
    %v1252 = vand.u32 %v1111, 4294901760
    %v1253 = vsub.f32 %v1111, %v1252
    %v1254 = vand.u32 %v1253, 4294901760
    %v1255 = vsub.f32 %v1253, %v1254
    %v1256 = vand.u32 %v1255, 4294901760
    %1257 = vmatpush1.msra.mxu0 %v1256
    %1258 = vmatprep.subr.mxu0 0.0
    %v1259 = vand.u32 %v1110, 4294901760
    %v1260 = vsub.f32 %v1110, %v1259
    %v1261 = vand.u32 %v1260, 4294901760
    %v1262 = vsub.f32 %v1260, %v1261
    %v1263 = vand.u32 %v1262, 4294901760
    %1264 = vmatpush1.msra.mxu0 %v1263
    %1265 = vmatprep.subr.mxu0 0.0
    %v1266 = vand.u32 %v1109, 4294901760
    %v1267 = vsub.f32 %v1109, %v1266
    %v1268 = vand.u32 %v1267, 4294901760
    %v1269 = vsub.f32 %v1267, %v1268
    %v1270 = vand.u32 %v1269, 4294901760
    %1271 = vmatpush1.msra.mxu0 %v1270
    %1272 = vmatprep.subr.mxu0 0.0
    %v1273 = vand.u32 %v1108, 4294901760
    %v1274 = vsub.f32 %v1108, %v1273
    %v1275 = vand.u32 %v1274, 4294901760
    %v1276 = vsub.f32 %v1274, %v1275
    %v1277 = vand.u32 %v1276, 4294901760
    %1278 = vmatpush1.msra.mxu0 %v1277
    %1279 = vmatprep.subr.mxu0 0.0
    %v1280 = vand.u32 %v1107, 4294901760
    %v1281 = vsub.f32 %v1107, %v1280
    %v1282 = vand.u32 %v1281, 4294901760
    %v1283 = vsub.f32 %v1281, %v1282
    %v1284 = vand.u32 %v1283, 4294901760
    %1285 = vmatpush1.msra.mxu0 %v1284
    %1286 = vmatprep.subr.mxu0 0.0
    %v1287 = vand.u32 %v1106, 4294901760
    %v1288 = vsub.f32 %v1106, %v1287
    %v1289 = vand.u32 %v1288, 4294901760
    %v1290 = vsub.f32 %v1288, %v1289
    %v1291 = vand.u32 %v1290, 4294901760
    %1292 = vmatpush1.msra.mxu0 %v1291
    %1293 = vmatprep.subr.mxu0 0.0
    %v1294 = vand.u32 %v1105, 4294901760
    %v1295 = vsub.f32 %v1105, %v1294
    %v1296 = vand.u32 %v1295, 4294901760
    %v1297 = vsub.f32 %v1295, %v1296
    %v1298 = vand.u32 %v1297, 4294901760
    %1299 = vmatpush1.msra.mxu0 %v1298
    %1300 = vmatprep.subr.mxu0 0.0
    %v1301 = vand.u32 %v1104, 4294901760
    %v1302 = vsub.f32 %v1104, %v1301
    %v1303 = vand.u32 %v1302, 4294901760
    %v1304 = vsub.f32 %v1302, %v1303
    %v1305 = vand.u32 %v1304, 4294901760
    %1306 = vmatpush1.msra.mxu0 %v1305
    %1307 = vmatprep.subr.mxu0 0.0
    %v1308 = vand.u32 %v1103, 4294901760
    %v1309 = vsub.f32 %v1103, %v1308
    %v1310 = vand.u32 %v1309, 4294901760
    %v1311 = vsub.f32 %v1309, %v1310
    %v1312 = vand.u32 %v1311, 4294901760
    %1313 = vmatpush1.msra.mxu0 %v1312
    %1314 = vmatprep.subr.mxu0 0.0
    %v1315 = vand.u32 %v1102, 4294901760
    %v1316 = vsub.f32 %v1102, %v1315
    %v1317 = vand.u32 %v1316, 4294901760
    %v1318 = vsub.f32 %v1316, %v1317
    %v1319 = vand.u32 %v1318, 4294901760
    %1320 = vmatpush1.msra.mxu0 %v1319
    %1321 = vmatprep.subr.mxu0 0.0
    %1322 = vmatpush2.msra.mxu0 0.0
    %1323 = vmatprep.subr.mxu0 0.0
    %1324 = vmatpush2.msra.mxu0 0.0
    %1325 = vmatprep.subr.mxu0 0.0
    %1326 = vmatpush2.msra.mxu0 0.0
    %1327 = vmatprep.subr.mxu0 0.0
    %1328 = vmatpush2.msra.mxu0 0.0
    %1329 = vmatprep.subr.mxu0 0.0
    %1330 = vmatpush2.msra.mxu0 0.0
    %1331 = vmatprep.subr.mxu0 0.0
    %1332 = vmatpush2.msra.mxu0 0.0
    %1333 = vmatprep.subr.mxu0 0.0
    %1334 = vmatpush2.msra.mxu0 0.0
    %1335 = vmatprep.subr.mxu0 0.0
    %1336 = vmatpush2.msra.mxu0 0.0
    %1337 = vmatprep.subr.mxu0 0.0
    %1338 = vmatpush2.msra.mxu0 0.0
    %1339 = vmatprep.subr.mxu0 0.0
    %1340 = vmatpush2.msra.mxu0 0.0
    %1341 = vmatprep.subr.mxu0 0.0
    %1342 = vmatpush2.msra.mxu0 0.0
    %1343 = vmatprep.subr.mxu0 0.0
    %1344 = vmatpush2.msra.mxu0 0.0
    %1345 = vmatprep.subr.mxu0 0.0
    %1346 = vmatpush2.msra.mxu0 0.0
    %1347 = vmatprep.subr.mxu0 0.0
    %1348 = vmatpush2.msra.mxu0 0.0
    %1349 = vmatprep.subr.mxu0 0.0
    %1350 = vmatpush2.msra.mxu0 0.0
    %1351 = vmatprep.subr.mxu0 0.0
    %1352 = vmatpush2.msra.mxu0 0.0
    %1353 = vmatprep.mubr.f32.mxu0 0.0
    %v1354 = vand.u32 %v1100, 4294901760
    %1355 = vmatmul.mubr.f32.gmra.mxu0 %v1354
    %v1356 = vpop.f32.mrf.mxu0
    %v1357 = vadd.f32 %v1206, %v1356
    %v1358 = vpop.f32.mrf.mxu0
    %1359 = vdwg.mxu0
    %1360 = vmatprep.subr.mxu0 0.0
    %v1361 = vand.u32 %v1117, 4294901760
    %v1362 = vsub.f32 %v1117, %v1361
    %1363 = vmatpush1.msra.mxu0 %v1362
    %1364 = vmatprep.subr.mxu0 0.0
    %v1365 = vand.u32 %v1116, 4294901760
    %v1366 = vsub.f32 %v1116, %v1365
    %1367 = vmatpush1.msra.mxu0 %v1366
    %1368 = vmatprep.subr.mxu0 0.0
    %v1369 = vand.u32 %v1115, 4294901760
    %v1370 = vsub.f32 %v1115, %v1369
    %1371 = vmatpush1.msra.mxu0 %v1370
    %1372 = vmatprep.subr.mxu0 0.0
    %v1373 = vand.u32 %v1114, 4294901760
    %v1374 = vsub.f32 %v1114, %v1373
    %1375 = vmatpush1.msra.mxu0 %v1374
    %1376 = vmatprep.subr.mxu0 0.0
    %v1377 = vand.u32 %v1113, 4294901760
    %v1378 = vsub.f32 %v1113, %v1377
    %1379 = vmatpush1.msra.mxu0 %v1378
    %1380 = vmatprep.subr.mxu0 0.0
    %v1381 = vand.u32 %v1112, 4294901760
    %v1382 = vsub.f32 %v1112, %v1381
    %1383 = vmatpush1.msra.mxu0 %v1382
    %1384 = vmatprep.subr.mxu0 0.0
    %v1385 = vand.u32 %v1111, 4294901760
    %v1386 = vsub.f32 %v1111, %v1385
    %1387 = vmatpush1.msra.mxu0 %v1386
    %1388 = vmatprep.subr.mxu0 0.0
    %v1389 = vand.u32 %v1110, 4294901760
    %v1390 = vsub.f32 %v1110, %v1389
    %1391 = vmatpush1.msra.mxu0 %v1390
    %1392 = vmatprep.subr.mxu0 0.0
    %v1393 = vand.u32 %v1109, 4294901760
    %v1394 = vsub.f32 %v1109, %v1393
    %1395 = vmatpush1.msra.mxu0 %v1394
    %1396 = vmatprep.subr.mxu0 0.0
    %v1397 = vand.u32 %v1108, 4294901760
    %v1398 = vsub.f32 %v1108, %v1397
    %1399 = vmatpush1.msra.mxu0 %v1398
    %1400 = vmatprep.subr.mxu0 0.0
    %v1401 = vand.u32 %v1107, 4294901760
    %v1402 = vsub.f32 %v1107, %v1401
    %1403 = vmatpush1.msra.mxu0 %v1402
    %1404 = vmatprep.subr.mxu0 0.0
    %v1405 = vand.u32 %v1106, 4294901760
    %v1406 = vsub.f32 %v1106, %v1405
    %1407 = vmatpush1.msra.mxu0 %v1406
    %1408 = vmatprep.subr.mxu0 0.0
    %v1409 = vand.u32 %v1105, 4294901760
    %v1410 = vsub.f32 %v1105, %v1409
    %1411 = vmatpush1.msra.mxu0 %v1410
    %1412 = vmatprep.subr.mxu0 0.0
    %v1413 = vand.u32 %v1104, 4294901760
    %v1414 = vsub.f32 %v1104, %v1413
    %1415 = vmatpush1.msra.mxu0 %v1414
    %1416 = vmatprep.subr.mxu0 0.0
    %v1417 = vand.u32 %v1103, 4294901760
    %v1418 = vsub.f32 %v1103, %v1417
    %1419 = vmatpush1.msra.mxu0 %v1418
    %1420 = vmatprep.subr.mxu0 0.0
    %v1421 = vand.u32 %v1102, 4294901760
    %v1422 = vsub.f32 %v1102, %v1421
    %1423 = vmatpush1.msra.mxu0 %v1422
    %1424 = vmatprep.subr.mxu0 0.0
    %1425 = vmatpush2.msra.mxu0 0.0
    %1426 = vmatprep.subr.mxu0 0.0
    %1427 = vmatpush2.msra.mxu0 0.0
    %1428 = vmatprep.subr.mxu0 0.0
    %1429 = vmatpush2.msra.mxu0 0.0
    %1430 = vmatprep.subr.mxu0 0.0
    %1431 = vmatpush2.msra.mxu0 0.0
    %1432 = vmatprep.subr.mxu0 0.0
    %1433 = vmatpush2.msra.mxu0 0.0
    %1434 = vmatprep.subr.mxu0 0.0
    %1435 = vmatpush2.msra.mxu0 0.0
    %1436 = vmatprep.subr.mxu0 0.0
    %1437 = vmatpush2.msra.mxu0 0.0
    %1438 = vmatprep.subr.mxu0 0.0
    %1439 = vmatpush2.msra.mxu0 0.0
    %1440 = vmatprep.subr.mxu0 0.0
    %1441 = vmatpush2.msra.mxu0 0.0
    %1442 = vmatprep.subr.mxu0 0.0
    %1443 = vmatpush2.msra.mxu0 0.0
    %1444 = vmatprep.subr.mxu0 0.0
    %1445 = vmatpush2.msra.mxu0 0.0
    %1446 = vmatprep.subr.mxu0 0.0
    %1447 = vmatpush2.msra.mxu0 0.0
    %1448 = vmatprep.subr.mxu0 0.0
    %1449 = vmatpush2.msra.mxu0 0.0
    %1450 = vmatprep.subr.mxu0 0.0
    %1451 = vmatpush2.msra.mxu0 0.0
    %1452 = vmatprep.subr.mxu0 0.0
    %1453 = vmatpush2.msra.mxu0 0.0
    %1454 = vmatprep.subr.mxu0 0.0
    %1455 = vmatpush2.msra.mxu0 0.0
    %1456 = vmatprep.mubr.f32.mxu0 0.0
    %v1457 = vand.u32 %v1100, 4294901760
    %v1458 = vsub.f32 %v1100, %v1457
    %1459 = vmatmul.mubr.f32.gmra.mxu0 %v1458
    %v1460 = vpop.f32.mrf.mxu0
    %v1461 = vadd.f32 %v1357, %v1460
    %v1462 = vpop.f32.mrf.mxu0
    %1463 = vdwg.mxu0
    %1464 = vmatprep.subr.mxu0 0.0
    %v1465 = vand.u32 %v1117, 4294901760
    %1466 = vmatpush1.msra.mxu0 %v1465
    %1467 = vmatprep.subr.mxu0 0.0
    %v1468 = vand.u32 %v1116, 4294901760
    %1469 = vmatpush1.msra.mxu0 %v1468
    %1470 = vmatprep.subr.mxu0 0.0
    %v1471 = vand.u32 %v1115, 4294901760
    %1472 = vmatpush1.msra.mxu0 %v1471
    %1473 = vmatprep.subr.mxu0 0.0
    %v1474 = vand.u32 %v1114, 4294901760
    %1475 = vmatpush1.msra.mxu0 %v1474
    %1476 = vmatprep.subr.mxu0 0.0
    %v1477 = vand.u32 %v1113, 4294901760
    %1478 = vmatpush1.msra.mxu0 %v1477
    %1479 = vmatprep.subr.mxu0 0.0
    %v1480 = vand.u32 %v1112, 4294901760
    %1481 = vmatpush1.msra.mxu0 %v1480
    %1482 = vmatprep.subr.mxu0 0.0
    %v1483 = vand.u32 %v1111, 4294901760
    %1484 = vmatpush1.msra.mxu0 %v1483
    %1485 = vmatprep.subr.mxu0 0.0
    %v1486 = vand.u32 %v1110, 4294901760
    %1487 = vmatpush1.msra.mxu0 %v1486
    %1488 = vmatprep.subr.mxu0 0.0
    %v1489 = vand.u32 %v1109, 4294901760
    %1490 = vmatpush1.msra.mxu0 %v1489
    %1491 = vmatprep.subr.mxu0 0.0
    %v1492 = vand.u32 %v1108, 4294901760
    %1493 = vmatpush1.msra.mxu0 %v1492
    %1494 = vmatprep.subr.mxu0 0.0
    %v1495 = vand.u32 %v1107, 4294901760
    %1496 = vmatpush1.msra.mxu0 %v1495
    %1497 = vmatprep.subr.mxu0 0.0
    %v1498 = vand.u32 %v1106, 4294901760
    %1499 = vmatpush1.msra.mxu0 %v1498
    %1500 = vmatprep.subr.mxu0 0.0
    %v1501 = vand.u32 %v1105, 4294901760
    %1502 = vmatpush1.msra.mxu0 %v1501
    %1503 = vmatprep.subr.mxu0 0.0
    %v1504 = vand.u32 %v1104, 4294901760
    %1505 = vmatpush1.msra.mxu0 %v1504
    %1506 = vmatprep.subr.mxu0 0.0
    %v1507 = vand.u32 %v1103, 4294901760
    %1508 = vmatpush1.msra.mxu0 %v1507
    %1509 = vmatprep.subr.mxu0 0.0
    %v1510 = vand.u32 %v1102, 4294901760
    %1511 = vmatpush1.msra.mxu0 %v1510
    %1512 = vmatprep.subr.mxu0 0.0
    %1513 = vmatpush2.msra.mxu0 0.0
    %1514 = vmatprep.subr.mxu0 0.0
    %1515 = vmatpush2.msra.mxu0 0.0
    %1516 = vmatprep.subr.mxu0 0.0
    %1517 = vmatpush2.msra.mxu0 0.0
    %1518 = vmatprep.subr.mxu0 0.0
    %1519 = vmatpush2.msra.mxu0 0.0
    %1520 = vmatprep.subr.mxu0 0.0
    %1521 = vmatpush2.msra.mxu0 0.0
    %1522 = vmatprep.subr.mxu0 0.0
    %1523 = vmatpush2.msra.mxu0 0.0
    %1524 = vmatprep.subr.mxu0 0.0
    %1525 = vmatpush2.msra.mxu0 0.0
    %1526 = vmatprep.subr.mxu0 0.0
    %1527 = vmatpush2.msra.mxu0 0.0
    %1528 = vmatprep.subr.mxu0 0.0
    %1529 = vmatpush2.msra.mxu0 0.0
    %1530 = vmatprep.subr.mxu0 0.0
    %1531 = vmatpush2.msra.mxu0 0.0
    %1532 = vmatprep.subr.mxu0 0.0
    %1533 = vmatpush2.msra.mxu0 0.0
    %1534 = vmatprep.subr.mxu0 0.0
    %1535 = vmatpush2.msra.mxu0 0.0
    %1536 = vmatprep.subr.mxu0 0.0
    %1537 = vmatpush2.msra.mxu0 0.0
    %1538 = vmatprep.subr.mxu0 0.0
    %1539 = vmatpush2.msra.mxu0 0.0
    %1540 = vmatprep.subr.mxu0 0.0
    %1541 = vmatpush2.msra.mxu0 0.0
    %1542 = vmatprep.subr.mxu0 0.0
    %1543 = vmatpush2.msra.mxu0 0.0
    %1544 = vmatprep.mubr.f32.mxu0 0.0
    %v1545 = vand.u32 %v1100, 4294901760
    %v1546 = vsub.f32 %v1100, %v1545
    %v1547 = vand.u32 %v1546, 4294901760
    %1548 = vmatmul.mubr.f32.gmra.mxu0 %v1547
    %v1549 = vpop.f32.mrf.mxu0
    %v1550 = vadd.f32 %v1461, %v1549
    %v1551 = vpop.f32.mrf.mxu0
    %1552 = vdwg.mxu0
    %1553 = vmatprep.subr.mxu0 0.0
    %v1554 = vand.u32 %v1117, 4294901760
    %v1555 = vsub.f32 %v1117, %v1554
    %v1556 = vand.u32 %v1555, 4294901760
    %1557 = vmatpush1.msra.mxu0 %v1556
    %1558 = vmatprep.subr.mxu0 0.0
    %v1559 = vand.u32 %v1116, 4294901760
    %v1560 = vsub.f32 %v1116, %v1559
    %v1561 = vand.u32 %v1560, 4294901760
    %1562 = vmatpush1.msra.mxu0 %v1561
    %1563 = vmatprep.subr.mxu0 0.0
    %v1564 = vand.u32 %v1115, 4294901760
    %v1565 = vsub.f32 %v1115, %v1564
    %v1566 = vand.u32 %v1565, 4294901760
    %1567 = vmatpush1.msra.mxu0 %v1566
    %1568 = vmatprep.subr.mxu0 0.0
    %v1569 = vand.u32 %v1114, 4294901760
    %v1570 = vsub.f32 %v1114, %v1569
    %v1571 = vand.u32 %v1570, 4294901760
    %1572 = vmatpush1.msra.mxu0 %v1571
    %1573 = vmatprep.subr.mxu0 0.0
    %v1574 = vand.u32 %v1113, 4294901760
    %v1575 = vsub.f32 %v1113, %v1574
    %v1576 = vand.u32 %v1575, 4294901760
    %1577 = vmatpush1.msra.mxu0 %v1576
    %1578 = vmatprep.subr.mxu0 0.0
    %v1579 = vand.u32 %v1112, 4294901760
    %v1580 = vsub.f32 %v1112, %v1579
    %v1581 = vand.u32 %v1580, 4294901760
    %1582 = vmatpush1.msra.mxu0 %v1581
    %1583 = vmatprep.subr.mxu0 0.0
    %v1584 = vand.u32 %v1111, 4294901760
    %v1585 = vsub.f32 %v1111, %v1584
    %v1586 = vand.u32 %v1585, 4294901760
    %1587 = vmatpush1.msra.mxu0 %v1586
    %1588 = vmatprep.subr.mxu0 0.0
    %v1589 = vand.u32 %v1110, 4294901760
    %v1590 = vsub.f32 %v1110, %v1589
    %v1591 = vand.u32 %v1590, 4294901760
    %1592 = vmatpush1.msra.mxu0 %v1591
    %1593 = vmatprep.subr.mxu0 0.0
    %v1594 = vand.u32 %v1109, 4294901760
    %v1595 = vsub.f32 %v1109, %v1594
    %v1596 = vand.u32 %v1595, 4294901760
    %1597 = vmatpush1.msra.mxu0 %v1596
    %1598 = vmatprep.subr.mxu0 0.0
    %v1599 = vand.u32 %v1108, 4294901760
    %v1600 = vsub.f32 %v1108, %v1599
    %v1601 = vand.u32 %v1600, 4294901760
    %1602 = vmatpush1.msra.mxu0 %v1601
    %1603 = vmatprep.subr.mxu0 0.0
    %v1604 = vand.u32 %v1107, 4294901760
    %v1605 = vsub.f32 %v1107, %v1604
    %v1606 = vand.u32 %v1605, 4294901760
    %1607 = vmatpush1.msra.mxu0 %v1606
    %1608 = vmatprep.subr.mxu0 0.0
    %v1609 = vand.u32 %v1106, 4294901760
    %v1610 = vsub.f32 %v1106, %v1609
    %v1611 = vand.u32 %v1610, 4294901760
    %1612 = vmatpush1.msra.mxu0 %v1611
    %1613 = vmatprep.subr.mxu0 0.0
    %v1614 = vand.u32 %v1105, 4294901760
    %v1615 = vsub.f32 %v1105, %v1614
    %v1616 = vand.u32 %v1615, 4294901760
    %1617 = vmatpush1.msra.mxu0 %v1616
    %1618 = vmatprep.subr.mxu0 0.0
    %v1619 = vand.u32 %v1104, 4294901760
    %v1620 = vsub.f32 %v1104, %v1619
    %v1621 = vand.u32 %v1620, 4294901760
    %1622 = vmatpush1.msra.mxu0 %v1621
    %1623 = vmatprep.subr.mxu0 0.0
    %v1624 = vand.u32 %v1103, 4294901760
    %v1625 = vsub.f32 %v1103, %v1624
    %v1626 = vand.u32 %v1625, 4294901760
    %1627 = vmatpush1.msra.mxu0 %v1626
    %1628 = vmatprep.subr.mxu0 0.0
    %v1629 = vand.u32 %v1102, 4294901760
    %v1630 = vsub.f32 %v1102, %v1629
    %v1631 = vand.u32 %v1630, 4294901760
    %1632 = vmatpush1.msra.mxu0 %v1631
    %1633 = vmatprep.subr.mxu0 0.0
    %1634 = vmatpush2.msra.mxu0 0.0
    %1635 = vmatprep.subr.mxu0 0.0
    %1636 = vmatpush2.msra.mxu0 0.0
    %1637 = vmatprep.subr.mxu0 0.0
    %1638 = vmatpush2.msra.mxu0 0.0
    %1639 = vmatprep.subr.mxu0 0.0
    %1640 = vmatpush2.msra.mxu0 0.0
    %1641 = vmatprep.subr.mxu0 0.0
    %1642 = vmatpush2.msra.mxu0 0.0
    %1643 = vmatprep.subr.mxu0 0.0
    %1644 = vmatpush2.msra.mxu0 0.0
    %1645 = vmatprep.subr.mxu0 0.0
    %1646 = vmatpush2.msra.mxu0 0.0
    %1647 = vmatprep.subr.mxu0 0.0
    %1648 = vmatpush2.msra.mxu0 0.0
    %1649 = vmatprep.subr.mxu0 0.0
    %1650 = vmatpush2.msra.mxu0 0.0
    %1651 = vmatprep.subr.mxu0 0.0
    %1652 = vmatpush2.msra.mxu0 0.0
    %1653 = vmatprep.subr.mxu0 0.0
    %1654 = vmatpush2.msra.mxu0 0.0
    %1655 = vmatprep.subr.mxu0 0.0
    %1656 = vmatpush2.msra.mxu0 0.0
    %1657 = vmatprep.subr.mxu0 0.0
    %1658 = vmatpush2.msra.mxu0 0.0
    %1659 = vmatprep.subr.mxu0 0.0
    %1660 = vmatpush2.msra.mxu0 0.0
    %1661 = vmatprep.subr.mxu0 0.0
    %1662 = vmatpush2.msra.mxu0 0.0
    %1663 = vmatprep.subr.mxu0 0.0
    %1664 = vmatpush2.msra.mxu0 0.0
    %1665 = vmatprep.mubr.f32.mxu0 0.0
    %v1666 = vand.u32 %v1100, 4294901760
    %1667 = vmatmul.mubr.f32.gmra.mxu0 %v1666
    %v1668 = vpop.f32.mrf.mxu0
    %v1669 = vadd.f32 %v1550, %v1668
    %v1670 = vpop.f32.mrf.mxu0
    %1671 = vdwg.mxu0
    %1672 = vmatprep.subr.mxu0 0.0
    %v1673 = vand.u32 %v1117, 4294901760
    %1674 = vmatpush1.msra.mxu0 %v1673
    %1675 = vmatprep.subr.mxu0 0.0
    %v1676 = vand.u32 %v1116, 4294901760
    %1677 = vmatpush1.msra.mxu0 %v1676
    %1678 = vmatprep.subr.mxu0 0.0
    %v1679 = vand.u32 %v1115, 4294901760
    %1680 = vmatpush1.msra.mxu0 %v1679
    %1681 = vmatprep.subr.mxu0 0.0
    %v1682 = vand.u32 %v1114, 4294901760
    %1683 = vmatpush1.msra.mxu0 %v1682
    %1684 = vmatprep.subr.mxu0 0.0
    %v1685 = vand.u32 %v1113, 4294901760
    %1686 = vmatpush1.msra.mxu0 %v1685
    %1687 = vmatprep.subr.mxu0 0.0
    %v1688 = vand.u32 %v1112, 4294901760
    %1689 = vmatpush1.msra.mxu0 %v1688
    %1690 = vmatprep.subr.mxu0 0.0
    %v1691 = vand.u32 %v1111, 4294901760
    %1692 = vmatpush1.msra.mxu0 %v1691
    %1693 = vmatprep.subr.mxu0 0.0
    %v1694 = vand.u32 %v1110, 4294901760
    %1695 = vmatpush1.msra.mxu0 %v1694
    %1696 = vmatprep.subr.mxu0 0.0
    %v1697 = vand.u32 %v1109, 4294901760
    %1698 = vmatpush1.msra.mxu0 %v1697
    %1699 = vmatprep.subr.mxu0 0.0
    %v1700 = vand.u32 %v1108, 4294901760
    %1701 = vmatpush1.msra.mxu0 %v1700
    %1702 = vmatprep.subr.mxu0 0.0
    %v1703 = vand.u32 %v1107, 4294901760
    %1704 = vmatpush1.msra.mxu0 %v1703
    %1705 = vmatprep.subr.mxu0 0.0
    %v1706 = vand.u32 %v1106, 4294901760
    %1707 = vmatpush1.msra.mxu0 %v1706
    %1708 = vmatprep.subr.mxu0 0.0
    %v1709 = vand.u32 %v1105, 4294901760
    %1710 = vmatpush1.msra.mxu0 %v1709
    %1711 = vmatprep.subr.mxu0 0.0
    %v1712 = vand.u32 %v1104, 4294901760
    %1713 = vmatpush1.msra.mxu0 %v1712
    %1714 = vmatprep.subr.mxu0 0.0
    %v1715 = vand.u32 %v1103, 4294901760
    %1716 = vmatpush1.msra.mxu0 %v1715
    %1717 = vmatprep.subr.mxu0 0.0
    %v1718 = vand.u32 %v1102, 4294901760
    %1719 = vmatpush1.msra.mxu0 %v1718
    %1720 = vmatprep.subr.mxu0 0.0
    %1721 = vmatpush2.msra.mxu0 0.0
    %1722 = vmatprep.subr.mxu0 0.0
    %1723 = vmatpush2.msra.mxu0 0.0
    %1724 = vmatprep.subr.mxu0 0.0
    %1725 = vmatpush2.msra.mxu0 0.0
    %1726 = vmatprep.subr.mxu0 0.0
    %1727 = vmatpush2.msra.mxu0 0.0
    %1728 = vmatprep.subr.mxu0 0.0
    %1729 = vmatpush2.msra.mxu0 0.0
    %1730 = vmatprep.subr.mxu0 0.0
    %1731 = vmatpush2.msra.mxu0 0.0
    %1732 = vmatprep.subr.mxu0 0.0
    %1733 = vmatpush2.msra.mxu0 0.0
    %1734 = vmatprep.subr.mxu0 0.0
    %1735 = vmatpush2.msra.mxu0 0.0
    %1736 = vmatprep.subr.mxu0 0.0
    %1737 = vmatpush2.msra.mxu0 0.0
    %1738 = vmatprep.subr.mxu0 0.0
    %1739 = vmatpush2.msra.mxu0 0.0
    %1740 = vmatprep.subr.mxu0 0.0
    %1741 = vmatpush2.msra.mxu0 0.0
    %1742 = vmatprep.subr.mxu0 0.0
    %1743 = vmatpush2.msra.mxu0 0.0
    %1744 = vmatprep.subr.mxu0 0.0
    %1745 = vmatpush2.msra.mxu0 0.0
    %1746 = vmatprep.subr.mxu0 0.0
    %1747 = vmatpush2.msra.mxu0 0.0
    %1748 = vmatprep.subr.mxu0 0.0
    %1749 = vmatpush2.msra.mxu0 0.0
    %1750 = vmatprep.subr.mxu0 0.0
    %1751 = vmatpush2.msra.mxu0 0.0
    %1752 = vmatprep.mubr.f32.mxu0 0.0
    %v1753 = vand.u32 %v1100, 4294901760
    %1754 = vmatmul.mubr.f32.gmra.mxu0 %v1753
    %v1755 = vpop.f32.mrf.mxu0
    %v1756 = vadd.f32 %v1669, %v1755
    %v1757 = vpop.f32.mrf.mxu0
    %1758 = vdwg.mxu0
    %1759 = vst [vmem:[#allocation9] sm:$0xff] %v1756
    // Predicated region
    $region30: #{tpu_custom_call.1} parent=1 // pred_check
      _
    $region31: #{tpu_custom_call.1} parent=1 // pred_check_branch
      %1761 = sbr.rel (0) target = $region33
    $region32: #{tpu_custom_call.1} parent=1 // pred_region
      %s1763 = ssub.s32 128, 128
      %1764 = vsyncadd [#allocation4], %s1763
      %s1766 = sshll.u32 [#allocation8], 4
      %s1767 = int_to_ptr.vmem [resolvable:$true] %s1766
      %1769 = dma.vmem_to_hbm [thread:$0]  %s1767, 128, %s4, [#allocation4]
    $region33: #{tpu_custom_call.1} parent=1 // pred_fallthru
      _
    // Predicated region
    $region34: #{tpu_custom_call.1} parent=1 // pred_check
      _
    $region35: #{tpu_custom_call.1} parent=1 // pred_check_branch
      %1771 = sbr.rel (0) target = $region37
    $region36: #{tpu_custom_call.1} parent=1 // pred_region
      %s1773 = ssub.s32 128, 128
      %1774 = vsyncadd [#allocation10], %s1773
      %s1776 = sshll.u32 [#allocation9], 4
      %s1777 = int_to_ptr.vmem [resolvable:$true] %s1776
      %1779 = dma.vmem_to_hbm [thread:$0]  %s1777, 128, %s5, [#allocation10]
    $region37: #{tpu_custom_call.1} parent=1 // pred_fallthru
      _
    // Predicated region
    $region38: #{tpu_custom_call.1} parent=1 // pred_check
      _
    $region39: #{tpu_custom_call.1} parent=1 // pred_check_branch
      %1781 = sbr.rel (0) target = $region41
    $region40: #{tpu_custom_call.1} parent=1 // pred_region
      %1782 = dma.done [#allocation4], 128
    $region41: #{tpu_custom_call.1} parent=1 // pred_fallthru
      _
    // Predicated region
    $region42: #{tpu_custom_call.1} parent=1 // pred_check
      _
    $region43: #{tpu_custom_call.1} parent=1 // pred_check_branch
      %1784 = sbr.rel (0) target = $region45
    $region44: #{tpu_custom_call.1} parent=1 // pred_region
      %1785 = dma.done [#allocation10], 128
    $region45: #{tpu_custom_call.1} parent=1 // pred_fallthru
      _
    %1786 = vsyncpa [#allocation3], 1
    %1787 = vsyncpa [#allocation6], 1
    %1788 = vsyncpa [#allocation4], 1
    %1789 = vsyncpa [#allocation10], 1

</llo_original>
